<compile_context>
chip_gen: v7x
topology: tpu7x:2x2x1
jax: 0.10.0
libtpu: 0.0.40
codegen_flags: <defaults>
</compile_context>

<pallas_src>
import functools

import jax
import jax.numpy as jnp
from jax import lax
from jax.experimental import pallas as pl
from jax.experimental.pallas import tpu as pltpu

EPS = 1e-5
TAPS = [(t // 3 - 1, t % 3 - 1) for t in range(9)]   # tap t = (dh+1)*3+(dw+1)


# ----------------------------- Pallas kernel ------------------------------

def _make_aam_kernel(C, N, H, W, KPAD):
    """Fully fused Aam forward: trunk + flatten + fc head in one kernel."""
    M = N * H * W
    HW = H * W
    inv_m = 1.0 / M

    def kernel(x_ref, masks_ref,
               cw_ref, cb_ref, bng_ref, bnb_ref,          # shared conv + BN
               c1w_ref, c1b_ref,                          # block.conv1
               dww_ref, dwb_ref, bg2_ref, bb2_ref,        # block dw-conv + BN
               dtw_ref, dtb_ref,                          # block dw-transpose conv
               fcw_ref, fcb_ref,                          # fc head (padded to 128)
               cls_ref, act_ref):
        masks = masks_ref[...]                            # (9, M) f32 {0,1}, host-built

        def taps_of(a):
            """9 shifted+masked copies of the (C, M) slab (zero-pad conv taps).
            Shifts ride the XLU; masks are a single VPU multiply."""
            out = []
            for t, (dh, dw) in enumerate(TAPS):
                off = dh * W + dw
                if off == 0:
                    out.append(a)                         # centre tap: mask is all-ones
                else:
                    rolled = pltpu.roll(a, shift=(-off) % M, axis=1)
                    out.append(rolled * masks[t:t + 1, :])
            return out

        # loop-invariant weights loaded once, before the fori_loop
        cw, cb = cw_ref[...], cb_ref[...]
        bng, bnb = bng_ref[...], bnb_ref[...]
        c1w, c1b = c1w_ref[...], c1b_ref[...]
        dww, dwb = dww_ref[...], dwb_ref[...]
        bg2, bb2 = bg2_ref[...], bb2_ref[...]
        dtw, dtb = dtw_ref[...], dtb_ref[...]

        def conv3x3(a, w9, b):
            # dense 3x3 conv as a single MXU matmul, bf16 in / f32 accumulate
            patches = jnp.concatenate(taps_of(a), axis=0).astype(jnp.bfloat16)
            return jnp.dot(w9, patches, preferred_element_type=jnp.float32) + b

        def dw3x3(a, w9, b):
            # depthwise 3x3: 9 per-channel FMAs on the VPU, kept in f32
            taps = taps_of(a)
            y = taps[0] * w9[:, 0:1]
            for t in range(1, 9):
                y = y + taps[t] * w9[:, t:t + 1]
            return y + b

        def bn_relu(y, g, b):
            # training-mode BatchNorm2d: independent sum / sum-of-squares
            # reductions, affine folded to one scale + one shift per channel.
            mean = jnp.sum(y, axis=1, keepdims=True) * inv_m
            ex2 = jnp.sum(y * y, axis=1, keepdims=True) * inv_m
            var = jnp.maximum(ex2 - mean * mean, 0.0)
            scale = lax.rsqrt(var + EPS) * g
            shift = b - mean * scale
            return jnp.maximum(y * scale + shift, 0.0)

        def stage(_, a):
            a = bn_relu(conv3x3(a, cw, cb), bng, bnb)
            h = conv3x3(a, c1w, c1b)
            h = h * (0.5 * (jnp.tanh(0.5 * h) + 1.0))     # SiLU: one EUP push
            h2 = bn_relu(dw3x3(h, dww, dwb), bg2, bb2)
            return dw3x3(h2, dtw, dtb) + a                # dw transpose conv + residual

        # rolled loop bounds live ranges (vs triplicated unroll)
        a = lax.fori_loop(0, 3, stage, x_ref[...])
        a = bn_relu(conv3x3(a, cw, cb), bng, bnb)
        act_ref[...] = a

        # fused fc head over the NCHW flatten:
        #   cls[n, :] = bias + sum_c a[c, n*HW:(n+1)*HW] @ W[c*HW:(c+1)*HW, :]
        # Weight rows stream per channel from the VMEM ref (never fully
        # vreg-resident); output is lane-dense (KPAD = 128-multiple).
        bias = fcb_ref[...]                               # (1, KPAD) f32
        for n in range(N):
            acc = bias
            for c in range(C):
                lhs = a[c:c + 1, n * HW:(n + 1) * HW].astype(jnp.bfloat16)
                rhs = fcw_ref[pl.ds(c * HW, HW), :]
                acc = acc + jnp.dot(lhs, rhs, preferred_element_type=jnp.float32)
            cls_ref[pl.ds(n, 1), :] = acc

    return kernel


# ------------------------------- JAX glue ----------------------------------

@functools.partial(jax.jit, static_argnames=('num_class',))
def aam_forward(x_nchw, kp, *, num_class):
    """x_nchw: (N, C, H, W) f32 -> (cls, bbox)."""
    N, C, H, W = x_nchw.shape
    M = N * H * W
    x = jnp.transpose(x_nchw, (1, 0, 2, 3)).reshape(C, M)   # (C, N*H*W) slab

    KPAD = kp['fc_w_pad'].shape[1]
    kernel = _make_aam_kernel(C, N, H, W, KPAD)
    args = (x, kp['masks'],
            kp['conv_w9'], kp['conv_b'], kp['bn_g'], kp['bn_b'],
            kp['c1_w9'], kp['c1_b'],
            kp['dw_w9'], kp['dw_b'], kp['bn2_g'], kp['bn2_b'],
            kp['dwt_w9'], kp['dwt_b'],
            kp['fc_w_pad'], kp['fc_b_pad'])

    cls_pad, act = pl.pallas_call(
        kernel,
        out_shape=(jax.ShapeDtypeStruct((N, KPAD), jnp.float32),
                   jax.ShapeDtypeStruct((C, M), jnp.float32)),
        in_specs=[pl.BlockSpec(memory_space=pltpu.MemorySpace.VMEM)] * len(args),
        out_specs=(pl.BlockSpec(memory_space=pltpu.MemorySpace.VMEM),
                   pl.BlockSpec(memory_space=pltpu.MemorySpace.VMEM)),
    )(*args)

    cls = cls_pad[:, :num_class]
    # TODO(synk): Detect() class is not provided in the reference model, so no
    # bbox head can be faithfully implemented; the flattened features (NCHW
    # order) are returned as a placeholder.  This transpose is off the cls
    # critical path and only feeds the placeholder output.
    bbox = jnp.transpose(act.reshape(C, N, H, W), (1, 0, 2, 3)).reshape(N, C * H * W)
    return cls, bbox


def prepare_params(params, num_class, N, H, W):
    """One-time (outside jit) conversion of PyTorch-layout params to kernel layouts."""
    C = params['conv_w'].shape[0]
    blk = params['block']
    M = N * H * W

    def conv_layout(w):  # (Cout, Cin, 3, 3) -> (Cout, 9*Cin) tap-major, bf16
        cout, cin = w.shape[:2]
        return jnp.transpose(w, (0, 2, 3, 1)).reshape(cout, 9 * cin).astype(jnp.bfloat16)

    # host-precomputed zero-padding boundary masks for the 9 conv taps
    lane = jnp.arange(M, dtype=jnp.int32)
    w_idx = lane % W
    h_idx = (lane // W) % H
    mask_rows = []
    for dh, dw in TAPS:
        hh, ww = h_idx + dh, w_idx + dw
        mask_rows.append((hh >= 0) & (hh < H) & (ww >= 0) & (ww < W))
    masks = jnp.stack(mask_rows, axis=0).astype(jnp.float32)          # (9, M)

    F = params['fc_w'].shape[1]
    k_pad = max(128, ((num_class + 127) // 128) * 128)                # lane-dense head
    fc_w_pad = jnp.zeros((F, k_pad), jnp.float32).at[:, :num_class].set(params['fc_w'].T)
    fc_b_pad = jnp.zeros((1, k_pad), jnp.float32).at[:, :num_class].set(params['fc_b'][None, :])

    return {
        'masks': masks,
        'conv_w9': conv_layout(params['conv_w']),
        'conv_b': params['conv_b'][:, None],
        'bn_g': params['bn_g'][:, None],
        'bn_b': params['bn_b'][:, None],
        'c1_w9': conv_layout(blk['conv1_w']),
        'c1_b': blk['conv1_b'][:, None],
        'dw_w9': blk['dw_w'].reshape(C, 9),                           # (C, 9) f32
        'dw_b': blk['dw_b'][:, None],
        'bn2_g': blk['bn_g'][:, None],
        'bn2_b': blk['bn_b'][:, None],
        'dwt_w9': blk['dwt_w'][:, 0, ::-1, ::-1].reshape(C, 9),       # spatial flip
        'dwt_b': blk['dwt_b'][:, None],
        'fc_w_pad': fc_w_pad.astype(jnp.bfloat16),
        'fc_b_pad': fc_b_pad,
    }


def init_params(key, C, num_class, H, W):
    ks = jax.random.split(key, 8)
    s = 0.1
    return {
        'conv_w': s * jax.random.normal(ks[0], (C, C, 3, 3), jnp.float32),
        'conv_b': s * jax.random.normal(ks[1], (C,), jnp.float32),
        'bn_g': jnp.ones((C,), jnp.float32),
        'bn_b': jnp.zeros((C,), jnp.float32),
        'block': {
            'conv1_w': s * jax.random.normal(ks[2], (C, C, 3, 3), jnp.float32),
            'conv1_b': s * jax.random.normal(ks[3], (C,), jnp.float32),
            'dw_w': s * jax.random.normal(ks[4], (C, 1, 3, 3), jnp.float32),
            'dw_b': s * jax.random.normal(ks[5], (C,), jnp.float32),
            'bn_g': jnp.ones((C,), jnp.float32),
            'bn_b': jnp.zeros((C,), jnp.float32),
            'dwt_w': s * jax.random.normal(ks[6], (C, 1, 3, 3), jnp.float32),
            'dwt_b': s * jax.random.normal(ks[7], (C,), jnp.float32),
        },
        'fc_w': s * jax.random.normal(jax.random.PRNGKey(42),
                                      (num_class, C * H * W), jnp.float32),
        'fc_b': jnp.zeros((num_class,), jnp.float32),
    }


if __name__ == "__main__":
    # in_channels == out_channels and k=3/s=1/p=1 required for the repeated
    # conv / residual chain to type-check.  N*H*W = 128 -> lane-dense slab.
    N, C, H, W = 2, 8, 8, 8
    num_class = 10

    key = jax.random.PRNGKey(0)
    kx, kparam = jax.random.split(key)
    x = jax.random.normal(kx, (N, C, H, W), jnp.float32)
    params = init_params(kparam, C, num_class, H, W)
    kp = prepare_params(params, num_class, N, H, W)     # one-time, outside the jit

    cls, bbox = aam_forward(x, kp, num_class=num_class)
    jax.block_until_ready((cls, bbox))

    assert cls.shape == (N, num_class)
    assert bbox.shape == (N, C * H * W)
    assert bool(jnp.all(jnp.isfinite(cls)))
    assert bool(jnp.all(jnp.isfinite(bbox)))
    print("KERNEL_OK")
</pallas_src>

<mosaic_0001>
module attributes {stable_mosaic.version = 11 : i64} {
  func.func @kernel(%arg0: memref<8x128xf32, #tpu.memory_space<vmem>>, %arg1: memref<9x128xf32, #tpu.memory_space<vmem>>, %arg2: memref<8x72xbf16, #tpu.memory_space<vmem>>, %arg3: memref<8x1xf32, #tpu.memory_space<vmem>>, %arg4: memref<8x1xf32, #tpu.memory_space<vmem>>, %arg5: memref<8x1xf32, #tpu.memory_space<vmem>>, %arg6: memref<8x72xbf16, #tpu.memory_space<vmem>>, %arg7: memref<8x1xf32, #tpu.memory_space<vmem>>, %arg8: memref<8x9xf32, #tpu.memory_space<vmem>>, %arg9: memref<8x1xf32, #tpu.memory_space<vmem>>, %arg10: memref<8x1xf32, #tpu.memory_space<vmem>>, %arg11: memref<8x1xf32, #tpu.memory_space<vmem>>, %arg12: memref<8x9xf32, #tpu.memory_space<vmem>>, %arg13: memref<8x1xf32, #tpu.memory_space<vmem>>, %arg14: memref<512x128xbf16, #tpu.memory_space<vmem>>, %arg15: memref<1x128xf32, #tpu.memory_space<vmem>>, %arg16: memref<2x128xf32, #tpu.memory_space<vmem>>, %arg17: memref<8x128xf32, #tpu.memory_space<vmem>>) attributes {dimension_semantics = [], scalar_prefetch = 0 : i64, scratch_operands = 0 : i64, tpu.core_type = #tpu.core_type<tc>} {
    %c0 = arith.constant 0 : index
    %c0_0 = arith.constant 0 : index
    %0 = vector.load %arg1[%c0, %c0_0] : memref<9x128xf32, #tpu.memory_space<vmem>>, vector<9x128xf32>
    %c0_1 = arith.constant 0 : index
    %c0_2 = arith.constant 0 : index
    %1 = vector.load %arg2[%c0_1, %c0_2] : memref<8x72xbf16, #tpu.memory_space<vmem>>, vector<8x72xbf16>
    %c0_3 = arith.constant 0 : index
    %c0_4 = arith.constant 0 : index
    %2 = vector.load %arg3[%c0_3, %c0_4] : memref<8x1xf32, #tpu.memory_space<vmem>>, vector<8x1xf32>
    %c0_5 = arith.constant 0 : index
    %c0_6 = arith.constant 0 : index
    %3 = vector.load %arg4[%c0_5, %c0_6] : memref<8x1xf32, #tpu.memory_space<vmem>>, vector<8x1xf32>
    %c0_7 = arith.constant 0 : index
    %c0_8 = arith.constant 0 : index
    %4 = vector.load %arg5[%c0_7, %c0_8] : memref<8x1xf32, #tpu.memory_space<vmem>>, vector<8x1xf32>
    %c0_9 = arith.constant 0 : index
    %c0_10 = arith.constant 0 : index
    %5 = vector.load %arg6[%c0_9, %c0_10] : memref<8x72xbf16, #tpu.memory_space<vmem>>, vector<8x72xbf16>
    %c0_11 = arith.constant 0 : index
    %c0_12 = arith.constant 0 : index
    %6 = vector.load %arg7[%c0_11, %c0_12] : memref<8x1xf32, #tpu.memory_space<vmem>>, vector<8x1xf32>
    %c0_13 = arith.constant 0 : index
    %c0_14 = arith.constant 0 : index
    %7 = vector.load %arg8[%c0_13, %c0_14] : memref<8x9xf32, #tpu.memory_space<vmem>>, vector<8x9xf32>
    %c0_15 = arith.constant 0 : index
    %c0_16 = arith.constant 0 : index
    %8 = vector.load %arg9[%c0_15, %c0_16] : memref<8x1xf32, #tpu.memory_space<vmem>>, vector<8x1xf32>
    %c0_17 = arith.constant 0 : index
    %c0_18 = arith.constant 0 : index
    %9 = vector.load %arg10[%c0_17, %c0_18] : memref<8x1xf32, #tpu.memory_space<vmem>>, vector<8x1xf32>
    %c0_19 = arith.constant 0 : index
    %c0_20 = arith.constant 0 : index
    %10 = vector.load %arg11[%c0_19, %c0_20] : memref<8x1xf32, #tpu.memory_space<vmem>>, vector<8x1xf32>
    %c0_21 = arith.constant 0 : index
    %c0_22 = arith.constant 0 : index
    %11 = vector.load %arg12[%c0_21, %c0_22] : memref<8x9xf32, #tpu.memory_space<vmem>>, vector<8x9xf32>
    %c0_23 = arith.constant 0 : index
    %c0_24 = arith.constant 0 : index
    %12 = vector.load %arg13[%c0_23, %c0_24] : memref<8x1xf32, #tpu.memory_space<vmem>>, vector<8x1xf32>
    %c0_25 = arith.constant 0 : index
    %c0_26 = arith.constant 0 : index
    %13 = vector.load %arg0[%c0_25, %c0_26] : memref<8x128xf32, #tpu.memory_space<vmem>>, vector<8x128xf32>
    %c0_i32 = arith.constant 0 : i32
    %c3_i32 = arith.constant 3 : i32
    %14 = arith.addi %c0_i32, %c3_i32 : i32
    %c1_i32 = arith.constant 1 : i32
    %15 = scf.for %arg18 = %c0_i32 to %14 step %c1_i32 iter_args(%arg19 = %13) -> (vector<8x128xf32>)  : i32 {
      %c9_i32_83 = arith.constant 9 : i32
      %162 = tpu.dynamic_rotate %arg19 by %c9_i32_83 dim 1 : vector<8x128xf32>, i32 -> vector<8x128xf32>
      %163 = vector.extract_strided_slice %0 {offsets = [0, 0], sizes = [1, 128], strides = [1, 1]} : vector<9x128xf32> to vector<1x128xf32>
      %164 = vector.broadcast %163 : vector<1x128xf32> to vector<8x128xf32>
      %165 = arith.mulf %162, %164 : vector<8x128xf32>
      %c8_i32_84 = arith.constant 8 : i32
      %166 = tpu.dynamic_rotate %arg19 by %c8_i32_84 dim 1 : vector<8x128xf32>, i32 -> vector<8x128xf32>
      %167 = vector.extract_strided_slice %0 {offsets = [1, 0], sizes = [1, 128], strides = [1, 1]} : vector<9x128xf32> to vector<1x128xf32>
      %168 = vector.broadcast %167 : vector<1x128xf32> to vector<8x128xf32>
      %169 = arith.mulf %166, %168 : vector<8x128xf32>
      %c7_i32_85 = arith.constant 7 : i32
      %170 = tpu.dynamic_rotate %arg19 by %c7_i32_85 dim 1 : vector<8x128xf32>, i32 -> vector<8x128xf32>
      %171 = vector.extract_strided_slice %0 {offsets = [2, 0], sizes = [1, 128], strides = [1, 1]} : vector<9x128xf32> to vector<1x128xf32>
      %172 = vector.broadcast %171 : vector<1x128xf32> to vector<8x128xf32>
      %173 = arith.mulf %170, %172 : vector<8x128xf32>
      %c1_i32_86 = arith.constant 1 : i32
      %174 = tpu.dynamic_rotate %arg19 by %c1_i32_86 dim 1 : vector<8x128xf32>, i32 -> vector<8x128xf32>
      %175 = vector.extract_strided_slice %0 {offsets = [3, 0], sizes = [1, 128], strides = [1, 1]} : vector<9x128xf32> to vector<1x128xf32>
      %176 = vector.broadcast %175 : vector<1x128xf32> to vector<8x128xf32>
      %177 = arith.mulf %174, %176 : vector<8x128xf32>
      %c127_i32_87 = arith.constant 127 : i32
      %178 = tpu.dynamic_rotate %arg19 by %c127_i32_87 dim 1 : vector<8x128xf32>, i32 -> vector<8x128xf32>
      %179 = vector.extract_strided_slice %0 {offsets = [5, 0], sizes = [1, 128], strides = [1, 1]} : vector<9x128xf32> to vector<1x128xf32>
      %180 = vector.broadcast %179 : vector<1x128xf32> to vector<8x128xf32>
      %181 = arith.mulf %178, %180 : vector<8x128xf32>
      %c121_i32_88 = arith.constant 121 : i32
      %182 = tpu.dynamic_rotate %arg19 by %c121_i32_88 dim 1 : vector<8x128xf32>, i32 -> vector<8x128xf32>
      %183 = vector.extract_strided_slice %0 {offsets = [6, 0], sizes = [1, 128], strides = [1, 1]} : vector<9x128xf32> to vector<1x128xf32>
      %184 = vector.broadcast %183 : vector<1x128xf32> to vector<8x128xf32>
      %185 = arith.mulf %182, %184 : vector<8x128xf32>
      %c120_i32_89 = arith.constant 120 : i32
      %186 = tpu.dynamic_rotate %arg19 by %c120_i32_89 dim 1 : vector<8x128xf32>, i32 -> vector<8x128xf32>
      %187 = vector.extract_strided_slice %0 {offsets = [7, 0], sizes = [1, 128], strides = [1, 1]} : vector<9x128xf32> to vector<1x128xf32>
      %188 = vector.broadcast %187 : vector<1x128xf32> to vector<8x128xf32>
      %189 = arith.mulf %186, %188 : vector<8x128xf32>
      %c119_i32_90 = arith.constant 119 : i32
      %190 = tpu.dynamic_rotate %arg19 by %c119_i32_90 dim 1 : vector<8x128xf32>, i32 -> vector<8x128xf32>
      %191 = vector.extract_strided_slice %0 {offsets = [8, 0], sizes = [1, 128], strides = [1, 1]} : vector<9x128xf32> to vector<1x128xf32>
      %192 = vector.broadcast %191 : vector<1x128xf32> to vector<8x128xf32>
      %193 = arith.mulf %190, %192 : vector<8x128xf32>
      %194 = tpu.concatenate %165, %169, %173, %177, %arg19, %181, %185, %189, %193 in 0 : vector<8x128xf32>, vector<8x128xf32>, vector<8x128xf32>, vector<8x128xf32>, vector<8x128xf32>, vector<8x128xf32>, vector<8x128xf32>, vector<8x128xf32>, vector<8x128xf32> -> vector<72x128xf32>
      %195 = arith.truncf %194 : vector<72x128xf32> to vector<72x128xbf16>
      %cst_91 = arith.constant dense<0.000000e+00> : vector<8x128xf32>
      %196 = tpu.matmul %1, %195, %cst_91 {dimension_numbers = #tpu.dot_dimension_numbers<[1], [0], [0], [1], [0, 0, 1, 1], [], []>} : vector<8x72xbf16>, vector<72x128xbf16>, vector<8x128xf32> -> vector<8x128xf32>
      %197 = vector.broadcast %2 : vector<8x1xf32> to vector<8x128xf32>
      %198 = arith.addf %196, %197 : vector<8x128xf32>
      %cst_92 = arith.constant dense<0.000000e+00> : vector<8xf32>
      %199 = vector.multi_reduction <add>, %198, %cst_92 [1] : vector<8x128xf32> to vector<8xf32>
      %200 = vector.shape_cast %199 : vector<8xf32> to vector<8x1xf32>
      %cst_93 = arith.constant 7.812500e-03 : f32
      %201 = vector.broadcast %cst_93 : f32 to vector<8x1xf32>
      %202 = arith.mulf %200, %201 : vector<8x1xf32>
      %203 = arith.mulf %198, %198 : vector<8x128xf32>
      %cst_94 = arith.constant dense<0.000000e+00> : vector<8xf32>
      %204 = vector.multi_reduction <add>, %203, %cst_94 [1] : vector<8x128xf32> to vector<8xf32>
      %205 = vector.shape_cast %204 : vector<8xf32> to vector<8x1xf32>
      %cst_95 = arith.constant 7.812500e-03 : f32
      %206 = vector.broadcast %cst_95 : f32 to vector<8x1xf32>
      %207 = arith.mulf %205, %206 : vector<8x1xf32>
      %208 = arith.mulf %202, %202 : vector<8x1xf32>
      %209 = arith.subf %207, %208 : vector<8x1xf32>
      %cst_96 = arith.constant 0.000000e+00 : f32
      %210 = vector.broadcast %cst_96 : f32 to vector<8x1xf32>
      %211 = arith.maximumf %209, %210 : vector<8x1xf32>
      %cst_97 = arith.constant 9.99999974E-6 : f32
      %212 = vector.broadcast %cst_97 : f32 to vector<8x1xf32>
      %213 = arith.addf %211, %212 : vector<8x1xf32>
      %214 = math.rsqrt %213 : vector<8x1xf32>
      %215 = arith.mulf %214, %3 : vector<8x1xf32>
      %216 = arith.mulf %202, %215 : vector<8x1xf32>
      %217 = arith.subf %4, %216 : vector<8x1xf32>
      %218 = vector.broadcast %215 : vector<8x1xf32> to vector<8x128xf32>
      %219 = arith.mulf %198, %218 : vector<8x128xf32>
      %220 = vector.broadcast %217 : vector<8x1xf32> to vector<8x128xf32>
      %221 = arith.addf %219, %220 : vector<8x128xf32>
      %cst_98 = arith.constant 0.000000e+00 : f32
      %222 = vector.broadcast %cst_98 : f32 to vector<8x128xf32>
      %223 = arith.maximumf %221, %222 : vector<8x128xf32>
      %c9_i32_99 = arith.constant 9 : i32
      %224 = tpu.dynamic_rotate %223 by %c9_i32_99 dim 1 : vector<8x128xf32>, i32 -> vector<8x128xf32>
      %225 = vector.extract_strided_slice %0 {offsets = [0, 0], sizes = [1, 128], strides = [1, 1]} : vector<9x128xf32> to vector<1x128xf32>
      %226 = vector.broadcast %225 : vector<1x128xf32> to vector<8x128xf32>
      %227 = arith.mulf %224, %226 : vector<8x128xf32>
      %c8_i32_100 = arith.constant 8 : i32
      %228 = tpu.dynamic_rotate %223 by %c8_i32_100 dim 1 : vector<8x128xf32>, i32 -> vector<8x128xf32>
      %229 = vector.extract_strided_slice %0 {offsets = [1, 0], sizes = [1, 128], strides = [1, 1]} : vector<9x128xf32> to vector<1x128xf32>
      %230 = vector.broadcast %229 : vector<1x128xf32> to vector<8x128xf32>
      %231 = arith.mulf %228, %230 : vector<8x128xf32>
      %c7_i32_101 = arith.constant 7 : i32
      %232 = tpu.dynamic_rotate %223 by %c7_i32_101 dim 1 : vector<8x128xf32>, i32 -> vector<8x128xf32>
      %233 = vector.extract_strided_slice %0 {offsets = [2, 0], sizes = [1, 128], strides = [1, 1]} : vector<9x128xf32> to vector<1x128xf32>
      %234 = vector.broadcast %233 : vector<1x128xf32> to vector<8x128xf32>
      %235 = arith.mulf %232, %234 : vector<8x128xf32>
      %c1_i32_102 = arith.constant 1 : i32
      %236 = tpu.dynamic_rotate %223 by %c1_i32_102 dim 1 : vector<8x128xf32>, i32 -> vector<8x128xf32>
      %237 = vector.extract_strided_slice %0 {offsets = [3, 0], sizes = [1, 128], strides = [1, 1]} : vector<9x128xf32> to vector<1x128xf32>
      %238 = vector.broadcast %237 : vector<1x128xf32> to vector<8x128xf32>
      %239 = arith.mulf %236, %238 : vector<8x128xf32>
      %c127_i32_103 = arith.constant 127 : i32
      %240 = tpu.dynamic_rotate %223 by %c127_i32_103 dim 1 : vector<8x128xf32>, i32 -> vector<8x128xf32>
      %241 = vector.extract_strided_slice %0 {offsets = [5, 0], sizes = [1, 128], strides = [1, 1]} : vector<9x128xf32> to vector<1x128xf32>
      %242 = vector.broadcast %241 : vector<1x128xf32> to vector<8x128xf32>
      %243 = arith.mulf %240, %242 : vector<8x128xf32>
      %c121_i32_104 = arith.constant 121 : i32
      %244 = tpu.dynamic_rotate %223 by %c121_i32_104 dim 1 : vector<8x128xf32>, i32 -> vector<8x128xf32>
      %245 = vector.extract_strided_slice %0 {offsets = [6, 0], sizes = [1, 128], strides = [1, 1]} : vector<9x128xf32> to vector<1x128xf32>
      %246 = vector.broadcast %245 : vector<1x128xf32> to vector<8x128xf32>
      %247 = arith.mulf %244, %246 : vector<8x128xf32>
      %c120_i32_105 = arith.constant 120 : i32
      %248 = tpu.dynamic_rotate %223 by %c120_i32_105 dim 1 : vector<8x128xf32>, i32 -> vector<8x128xf32>
      %249 = vector.extract_strided_slice %0 {offsets = [7, 0], sizes = [1, 128], strides = [1, 1]} : vector<9x128xf32> to vector<1x128xf32>
      %250 = vector.broadcast %249 : vector<1x128xf32> to vector<8x128xf32>
      %251 = arith.mulf %248, %250 : vector<8x128xf32>
      %c119_i32_106 = arith.constant 119 : i32
      %252 = tpu.dynamic_rotate %223 by %c119_i32_106 dim 1 : vector<8x128xf32>, i32 -> vector<8x128xf32>
      %253 = vector.extract_strided_slice %0 {offsets = [8, 0], sizes = [1, 128], strides = [1, 1]} : vector<9x128xf32> to vector<1x128xf32>
      %254 = vector.broadcast %253 : vector<1x128xf32> to vector<8x128xf32>
      %255 = arith.mulf %252, %254 : vector<8x128xf32>
      %256 = tpu.concatenate %227, %231, %235, %239, %223, %243, %247, %251, %255 in 0 : vector<8x128xf32>, vector<8x128xf32>, vector<8x128xf32>, vector<8x128xf32>, vector<8x128xf32>, vector<8x128xf32>, vector<8x128xf32>, vector<8x128xf32>, vector<8x128xf32> -> vector<72x128xf32>
      %257 = arith.truncf %256 : vector<72x128xf32> to vector<72x128xbf16>
      %cst_107 = arith.constant dense<0.000000e+00> : vector<8x128xf32>
      %258 = tpu.matmul %5, %257, %cst_107 {dimension_numbers = #tpu.dot_dimension_numbers<[1], [0], [0], [1], [0, 0, 1, 1], [], []>} : vector<8x72xbf16>, vector<72x128xbf16>, vector<8x128xf32> -> vector<8x128xf32>
      %259 = vector.broadcast %6 : vector<8x1xf32> to vector<8x128xf32>
      %260 = arith.addf %258, %259 : vector<8x128xf32>
      %cst_108 = arith.constant 5.000000e-01 : f32
      %261 = vector.broadcast %cst_108 : f32 to vector<8x128xf32>
      %262 = arith.mulf %261, %260 : vector<8x128xf32>
      %263 = math.tanh %262 : vector<8x128xf32>
      %cst_109 = arith.constant 1.000000e+00 : f32
      %264 = vector.broadcast %cst_109 : f32 to vector<8x128xf32>
      %265 = arith.addf %263, %264 : vector<8x128xf32>
      %cst_110 = arith.constant 5.000000e-01 : f32
      %266 = vector.broadcast %cst_110 : f32 to vector<8x128xf32>
      %267 = arith.mulf %266, %265 : vector<8x128xf32>
      %268 = arith.mulf %260, %267 : vector<8x128xf32>
      %c9_i32_111 = arith.constant 9 : i32
      %269 = tpu.dynamic_rotate %268 by %c9_i32_111 dim 1 : vector<8x128xf32>, i32 -> vector<8x128xf32>
      %270 = vector.extract_strided_slice %0 {offsets = [0, 0], sizes = [1, 128], strides = [1, 1]} : vector<9x128xf32> to vector<1x128xf32>
      %271 = vector.broadcast %270 : vector<1x128xf32> to vector<8x128xf32>
      %272 = arith.mulf %269, %271 : vector<8x128xf32>
      %c8_i32_112 = arith.constant 8 : i32
      %273 = tpu.dynamic_rotate %268 by %c8_i32_112 dim 1 : vector<8x128xf32>, i32 -> vector<8x128xf32>
      %274 = vector.extract_strided_slice %0 {offsets = [1, 0], sizes = [1, 128], strides = [1, 1]} : vector<9x128xf32> to vector<1x128xf32>
      %275 = vector.broadcast %274 : vector<1x128xf32> to vector<8x128xf32>
      %276 = arith.mulf %273, %275 : vector<8x128xf32>
      %c7_i32_113 = arith.constant 7 : i32
      %277 = tpu.dynamic_rotate %268 by %c7_i32_113 dim 1 : vector<8x128xf32>, i32 -> vector<8x128xf32>
      %278 = vector.extract_strided_slice %0 {offsets = [2, 0], sizes = [1, 128], strides = [1, 1]} : vector<9x128xf32> to vector<1x128xf32>
      %279 = vector.broadcast %278 : vector<1x128xf32> to vector<8x128xf32>
      %280 = arith.mulf %277, %279 : vector<8x128xf32>
      %c1_i32_114 = arith.constant 1 : i32
      %281 = tpu.dynamic_rotate %268 by %c1_i32_114 dim 1 : vector<8x128xf32>, i32 -> vector<8x128xf32>
      %282 = vector.extract_strided_slice %0 {offsets = [3, 0], sizes = [1, 128], strides = [1, 1]} : vector<9x128xf32> to vector<1x128xf32>
      %283 = vector.broadcast %282 : vector<1x128xf32> to vector<8x128xf32>
      %284 = arith.mulf %281, %283 : vector<8x128xf32>
      %c127_i32_115 = arith.constant 127 : i32
      %285 = tpu.dynamic_rotate %268 by %c127_i32_115 dim 1 : vector<8x128xf32>, i32 -> vector<8x128xf32>
      %286 = vector.extract_strided_slice %0 {offsets = [5, 0], sizes = [1, 128], strides = [1, 1]} : vector<9x128xf32> to vector<1x128xf32>
      %287 = vector.broadcast %286 : vector<1x128xf32> to vector<8x128xf32>
      %288 = arith.mulf %285, %287 : vector<8x128xf32>
      %c121_i32_116 = arith.constant 121 : i32
      %289 = tpu.dynamic_rotate %268 by %c121_i32_116 dim 1 : vector<8x128xf32>, i32 -> vector<8x128xf32>
      %290 = vector.extract_strided_slice %0 {offsets = [6, 0], sizes = [1, 128], strides = [1, 1]} : vector<9x128xf32> to vector<1x128xf32>
      %291 = vector.broadcast %290 : vector<1x128xf32> to vector<8x128xf32>
      %292 = arith.mulf %289, %291 : vector<8x128xf32>
      %c120_i32_117 = arith.constant 120 : i32
      %293 = tpu.dynamic_rotate %268 by %c120_i32_117 dim 1 : vector<8x128xf32>, i32 -> vector<8x128xf32>
      %294 = vector.extract_strided_slice %0 {offsets = [7, 0], sizes = [1, 128], strides = [1, 1]} : vector<9x128xf32> to vector<1x128xf32>
      %295 = vector.broadcast %294 : vector<1x128xf32> to vector<8x128xf32>
      %296 = arith.mulf %293, %295 : vector<8x128xf32>
      %c119_i32_118 = arith.constant 119 : i32
      %297 = tpu.dynamic_rotate %268 by %c119_i32_118 dim 1 : vector<8x128xf32>, i32 -> vector<8x128xf32>
      %298 = vector.extract_strided_slice %0 {offsets = [8, 0], sizes = [1, 128], strides = [1, 1]} : vector<9x128xf32> to vector<1x128xf32>
      %299 = vector.broadcast %298 : vector<1x128xf32> to vector<8x128xf32>
      %300 = arith.mulf %297, %299 : vector<8x128xf32>
      %301 = vector.extract_strided_slice %7 {offsets = [0, 0], sizes = [8, 1], strides = [1, 1]} : vector<8x9xf32> to vector<8x1xf32>
      %302 = vector.broadcast %301 : vector<8x1xf32> to vector<8x128xf32>
      %303 = arith.mulf %272, %302 : vector<8x128xf32>
      %304 = vector.extract_strided_slice %7 {offsets = [0, 1], sizes = [8, 1], strides = [1, 1]} : vector<8x9xf32> to vector<8x1xf32>
      %305 = vector.broadcast %304 : vector<8x1xf32> to vector<8x128xf32>
      %306 = arith.mulf %276, %305 : vector<8x128xf32>
      %307 = arith.addf %303, %306 : vector<8x128xf32>
      %308 = vector.extract_strided_slice %7 {offsets = [0, 2], sizes = [8, 1], strides = [1, 1]} : vector<8x9xf32> to vector<8x1xf32>
      %309 = vector.broadcast %308 : vector<8x1xf32> to vector<8x128xf32>
      %310 = arith.mulf %280, %309 : vector<8x128xf32>
      %311 = arith.addf %307, %310 : vector<8x128xf32>
      %312 = vector.extract_strided_slice %7 {offsets = [0, 3], sizes = [8, 1], strides = [1, 1]} : vector<8x9xf32> to vector<8x1xf32>
      %313 = vector.broadcast %312 : vector<8x1xf32> to vector<8x128xf32>
      %314 = arith.mulf %284, %313 : vector<8x128xf32>
      %315 = arith.addf %311, %314 : vector<8x128xf32>
      %316 = vector.extract_strided_slice %7 {offsets = [0, 4], sizes = [8, 1], strides = [1, 1]} : vector<8x9xf32> to vector<8x1xf32>
      %317 = vector.broadcast %316 : vector<8x1xf32> to vector<8x128xf32>
      %318 = arith.mulf %268, %317 : vector<8x128xf32>
      %319 = arith.addf %315, %318 : vector<8x128xf32>
      %320 = vector.extract_strided_slice %7 {offsets = [0, 5], sizes = [8, 1], strides = [1, 1]} : vector<8x9xf32> to vector<8x1xf32>
      %321 = vector.broadcast %320 : vector<8x1xf32> to vector<8x128xf32>
      %322 = arith.mulf %288, %321 : vector<8x128xf32>
      %323 = arith.addf %319, %322 : vector<8x128xf32>
      %324 = vector.extract_strided_slice %7 {offsets = [0, 6], sizes = [8, 1], strides = [1, 1]} : vector<8x9xf32> to vector<8x1xf32>
      %325 = vector.broadcast %324 : vector<8x1xf32> to vector<8x128xf32>
      %326 = arith.mulf %292, %325 : vector<8x128xf32>
      %327 = arith.addf %323, %326 : vector<8x128xf32>
      %328 = vector.extract_strided_slice %7 {offsets = [0, 7], sizes = [8, 1], strides = [1, 1]} : vector<8x9xf32> to vector<8x1xf32>
      %329 = vector.broadcast %328 : vector<8x1xf32> to vector<8x128xf32>
      %330 = arith.mulf %296, %329 : vector<8x128xf32>
      %331 = arith.addf %327, %330 : vector<8x128xf32>
      %332 = vector.extract_strided_slice %7 {offsets = [0, 8], sizes = [8, 1], strides = [1, 1]} : vector<8x9xf32> to vector<8x1xf32>
      %333 = vector.broadcast %332 : vector<8x1xf32> to vector<8x128xf32>
      %334 = arith.mulf %300, %333 : vector<8x128xf32>
      %335 = arith.addf %331, %334 : vector<8x128xf32>
      %336 = vector.broadcast %8 : vector<8x1xf32> to vector<8x128xf32>
      %337 = arith.addf %335, %336 : vector<8x128xf32>
      %cst_119 = arith.constant dense<0.000000e+00> : vector<8xf32>
      %338 = vector.multi_reduction <add>, %337, %cst_119 [1] : vector<8x128xf32> to vector<8xf32>
      %339 = vector.shape_cast %338 : vector<8xf32> to vector<8x1xf32>
      %cst_120 = arith.constant 7.812500e-03 : f32
      %340 = vector.broadcast %cst_120 : f32 to vector<8x1xf32>
      %341 = arith.mulf %339, %340 : vector<8x1xf32>
      %342 = arith.mulf %337, %337 : vector<8x128xf32>
      %cst_121 = arith.constant dense<0.000000e+00> : vector<8xf32>
      %343 = vector.multi_reduction <add>, %342, %cst_121 [1] : vector<8x128xf32> to vector<8xf32>
      %344 = vector.shape_cast %343 : vector<8xf32> to vector<8x1xf32>
      %cst_122 = arith.constant 7.812500e-03 : f32
      %345 = vector.broadcast %cst_122 : f32 to vector<8x1xf32>
      %346 = arith.mulf %344, %345 : vector<8x1xf32>
      %347 = arith.mulf %341, %341 : vector<8x1xf32>
      %348 = arith.subf %346, %347 : vector<8x1xf32>
      %cst_123 = arith.constant 0.000000e+00 : f32
      %349 = vector.broadcast %cst_123 : f32 to vector<8x1xf32>
      %350 = arith.maximumf %348, %349 : vector<8x1xf32>
      %cst_124 = arith.constant 9.99999974E-6 : f32
      %351 = vector.broadcast %cst_124 : f32 to vector<8x1xf32>
      %352 = arith.addf %350, %351 : vector<8x1xf32>
      %353 = math.rsqrt %352 : vector<8x1xf32>
      %354 = arith.mulf %353, %9 : vector<8x1xf32>
      %355 = arith.mulf %341, %354 : vector<8x1xf32>
      %356 = arith.subf %10, %355 : vector<8x1xf32>
      %357 = vector.broadcast %354 : vector<8x1xf32> to vector<8x128xf32>
      %358 = arith.mulf %337, %357 : vector<8x128xf32>
      %359 = vector.broadcast %356 : vector<8x1xf32> to vector<8x128xf32>
      %360 = arith.addf %358, %359 : vector<8x128xf32>
      %cst_125 = arith.constant 0.000000e+00 : f32
      %361 = vector.broadcast %cst_125 : f32 to vector<8x128xf32>
      %362 = arith.maximumf %360, %361 : vector<8x128xf32>
      %c9_i32_126 = arith.constant 9 : i32
      %363 = tpu.dynamic_rotate %362 by %c9_i32_126 dim 1 : vector<8x128xf32>, i32 -> vector<8x128xf32>
      %364 = vector.extract_strided_slice %0 {offsets = [0, 0], sizes = [1, 128], strides = [1, 1]} : vector<9x128xf32> to vector<1x128xf32>
      %365 = vector.broadcast %364 : vector<1x128xf32> to vector<8x128xf32>
      %366 = arith.mulf %363, %365 : vector<8x128xf32>
      %c8_i32_127 = arith.constant 8 : i32
      %367 = tpu.dynamic_rotate %362 by %c8_i32_127 dim 1 : vector<8x128xf32>, i32 -> vector<8x128xf32>
      %368 = vector.extract_strided_slice %0 {offsets = [1, 0], sizes = [1, 128], strides = [1, 1]} : vector<9x128xf32> to vector<1x128xf32>
      %369 = vector.broadcast %368 : vector<1x128xf32> to vector<8x128xf32>
      %370 = arith.mulf %367, %369 : vector<8x128xf32>
      %c7_i32_128 = arith.constant 7 : i32
      %371 = tpu.dynamic_rotate %362 by %c7_i32_128 dim 1 : vector<8x128xf32>, i32 -> vector<8x128xf32>
      %372 = vector.extract_strided_slice %0 {offsets = [2, 0], sizes = [1, 128], strides = [1, 1]} : vector<9x128xf32> to vector<1x128xf32>
      %373 = vector.broadcast %372 : vector<1x128xf32> to vector<8x128xf32>
      %374 = arith.mulf %371, %373 : vector<8x128xf32>
      %c1_i32_129 = arith.constant 1 : i32
      %375 = tpu.dynamic_rotate %362 by %c1_i32_129 dim 1 : vector<8x128xf32>, i32 -> vector<8x128xf32>
      %376 = vector.extract_strided_slice %0 {offsets = [3, 0], sizes = [1, 128], strides = [1, 1]} : vector<9x128xf32> to vector<1x128xf32>
      %377 = vector.broadcast %376 : vector<1x128xf32> to vector<8x128xf32>
      %378 = arith.mulf %375, %377 : vector<8x128xf32>
      %c127_i32_130 = arith.constant 127 : i32
      %379 = tpu.dynamic_rotate %362 by %c127_i32_130 dim 1 : vector<8x128xf32>, i32 -> vector<8x128xf32>
      %380 = vector.extract_strided_slice %0 {offsets = [5, 0], sizes = [1, 128], strides = [1, 1]} : vector<9x128xf32> to vector<1x128xf32>
      %381 = vector.broadcast %380 : vector<1x128xf32> to vector<8x128xf32>
      %382 = arith.mulf %379, %381 : vector<8x128xf32>
      %c121_i32_131 = arith.constant 121 : i32
      %383 = tpu.dynamic_rotate %362 by %c121_i32_131 dim 1 : vector<8x128xf32>, i32 -> vector<8x128xf32>
      %384 = vector.extract_strided_slice %0 {offsets = [6, 0], sizes = [1, 128], strides = [1, 1]} : vector<9x128xf32> to vector<1x128xf32>
      %385 = vector.broadcast %384 : vector<1x128xf32> to vector<8x128xf32>
      %386 = arith.mulf %383, %385 : vector<8x128xf32>
      %c120_i32_132 = arith.constant 120 : i32
      %387 = tpu.dynamic_rotate %362 by %c120_i32_132 dim 1 : vector<8x128xf32>, i32 -> vector<8x128xf32>
      %388 = vector.extract_strided_slice %0 {offsets = [7, 0], sizes = [1, 128], strides = [1, 1]} : vector<9x128xf32> to vector<1x128xf32>
      %389 = vector.broadcast %388 : vector<1x128xf32> to vector<8x128xf32>
      %390 = arith.mulf %387, %389 : vector<8x128xf32>
      %c119_i32_133 = arith.constant 119 : i32
      %391 = tpu.dynamic_rotate %362 by %c119_i32_133 dim 1 : vector<8x128xf32>, i32 -> vector<8x128xf32>
      %392 = vector.extract_strided_slice %0 {offsets = [8, 0], sizes = [1, 128], strides = [1, 1]} : vector<9x128xf32> to vector<1x128xf32>
      %393 = vector.broadcast %392 : vector<1x128xf32> to vector<8x128xf32>
      %394 = arith.mulf %391, %393 : vector<8x128xf32>
      %395 = vector.extract_strided_slice %11 {offsets = [0, 0], sizes = [8, 1], strides = [1, 1]} : vector<8x9xf32> to vector<8x1xf32>
      %396 = vector.broadcast %395 : vector<8x1xf32> to vector<8x128xf32>
      %397 = arith.mulf %366, %396 : vector<8x128xf32>
      %398 = vector.extract_strided_slice %11 {offsets = [0, 1], sizes = [8, 1], strides = [1, 1]} : vector<8x9xf32> to vector<8x1xf32>
      %399 = vector.broadcast %398 : vector<8x1xf32> to vector<8x128xf32>
      %400 = arith.mulf %370, %399 : vector<8x128xf32>
      %401 = arith.addf %397, %400 : vector<8x128xf32>
      %402 = vector.extract_strided_slice %11 {offsets = [0, 2], sizes = [8, 1], strides = [1, 1]} : vector<8x9xf32> to vector<8x1xf32>
      %403 = vector.broadcast %402 : vector<8x1xf32> to vector<8x128xf32>
      %404 = arith.mulf %374, %403 : vector<8x128xf32>
      %405 = arith.addf %401, %404 : vector<8x128xf32>
      %406 = vector.extract_strided_slice %11 {offsets = [0, 3], sizes = [8, 1], strides = [1, 1]} : vector<8x9xf32> to vector<8x1xf32>
      %407 = vector.broadcast %406 : vector<8x1xf32> to vector<8x128xf32>
      %408 = arith.mulf %378, %407 : vector<8x128xf32>
      %409 = arith.addf %405, %408 : vector<8x128xf32>
      %410 = vector.extract_strided_slice %11 {offsets = [0, 4], sizes = [8, 1], strides = [1, 1]} : vector<8x9xf32> to vector<8x1xf32>
      %411 = vector.broadcast %410 : vector<8x1xf32> to vector<8x128xf32>
      %412 = arith.mulf %362, %411 : vector<8x128xf32>
      %413 = arith.addf %409, %412 : vector<8x128xf32>
      %414 = vector.extract_strided_slice %11 {offsets = [0, 5], sizes = [8, 1], strides = [1, 1]} : vector<8x9xf32> to vector<8x1xf32>
      %415 = vector.broadcast %414 : vector<8x1xf32> to vector<8x128xf32>
      %416 = arith.mulf %382, %415 : vector<8x128xf32>
      %417 = arith.addf %413, %416 : vector<8x128xf32>
      %418 = vector.extract_strided_slice %11 {offsets = [0, 6], sizes = [8, 1], strides = [1, 1]} : vector<8x9xf32> to vector<8x1xf32>
      %419 = vector.broadcast %418 : vector<8x1xf32> to vector<8x128xf32>
      %420 = arith.mulf %386, %419 : vector<8x128xf32>
      %421 = arith.addf %417, %420 : vector<8x128xf32>
      %422 = vector.extract_strided_slice %11 {offsets = [0, 7], sizes = [8, 1], strides = [1, 1]} : vector<8x9xf32> to vector<8x1xf32>
      %423 = vector.broadcast %422 : vector<8x1xf32> to vector<8x128xf32>
      %424 = arith.mulf %390, %423 : vector<8x128xf32>
      %425 = arith.addf %421, %424 : vector<8x128xf32>
      %426 = vector.extract_strided_slice %11 {offsets = [0, 8], sizes = [8, 1], strides = [1, 1]} : vector<8x9xf32> to vector<8x1xf32>
      %427 = vector.broadcast %426 : vector<8x1xf32> to vector<8x128xf32>
      %428 = arith.mulf %394, %427 : vector<8x128xf32>
      %429 = arith.addf %425, %428 : vector<8x128xf32>
      %430 = vector.broadcast %12 : vector<8x1xf32> to vector<8x128xf32>
      %431 = arith.addf %429, %430 : vector<8x128xf32>
      %432 = arith.addf %431, %223 : vector<8x128xf32>
      scf.yield %432 : vector<8x128xf32>
    }
    %c9_i32 = arith.constant 9 : i32
    %16 = tpu.dynamic_rotate %15 by %c9_i32 dim 1 : vector<8x128xf32>, i32 -> vector<8x128xf32>
    %17 = vector.extract_strided_slice %0 {offsets = [0, 0], sizes = [1, 128], strides = [1, 1]} : vector<9x128xf32> to vector<1x128xf32>
    %18 = vector.broadcast %17 : vector<1x128xf32> to vector<8x128xf32>
    %19 = arith.mulf %16, %18 : vector<8x128xf32>
    %c8_i32 = arith.constant 8 : i32
    %20 = tpu.dynamic_rotate %15 by %c8_i32 dim 1 : vector<8x128xf32>, i32 -> vector<8x128xf32>
    %21 = vector.extract_strided_slice %0 {offsets = [1, 0], sizes = [1, 128], strides = [1, 1]} : vector<9x128xf32> to vector<1x128xf32>
    %22 = vector.broadcast %21 : vector<1x128xf32> to vector<8x128xf32>
    %23 = arith.mulf %20, %22 : vector<8x128xf32>
    %c7_i32 = arith.constant 7 : i32
    %24 = tpu.dynamic_rotate %15 by %c7_i32 dim 1 : vector<8x128xf32>, i32 -> vector<8x128xf32>
    %25 = vector.extract_strided_slice %0 {offsets = [2, 0], sizes = [1, 128], strides = [1, 1]} : vector<9x128xf32> to vector<1x128xf32>
    %26 = vector.broadcast %25 : vector<1x128xf32> to vector<8x128xf32>
    %27 = arith.mulf %24, %26 : vector<8x128xf32>
    %c1_i32_27 = arith.constant 1 : i32
    %28 = tpu.dynamic_rotate %15 by %c1_i32_27 dim 1 : vector<8x128xf32>, i32 -> vector<8x128xf32>
    %29 = vector.extract_strided_slice %0 {offsets = [3, 0], sizes = [1, 128], strides = [1, 1]} : vector<9x128xf32> to vector<1x128xf32>
    %30 = vector.broadcast %29 : vector<1x128xf32> to vector<8x128xf32>
    %31 = arith.mulf %28, %30 : vector<8x128xf32>
    %c127_i32 = arith.constant 127 : i32
    %32 = tpu.dynamic_rotate %15 by %c127_i32 dim 1 : vector<8x128xf32>, i32 -> vector<8x128xf32>
    %33 = vector.extract_strided_slice %0 {offsets = [5, 0], sizes = [1, 128], strides = [1, 1]} : vector<9x128xf32> to vector<1x128xf32>
    %34 = vector.broadcast %33 : vector<1x128xf32> to vector<8x128xf32>
    %35 = arith.mulf %32, %34 : vector<8x128xf32>
    %c121_i32 = arith.constant 121 : i32
    %36 = tpu.dynamic_rotate %15 by %c121_i32 dim 1 : vector<8x128xf32>, i32 -> vector<8x128xf32>
    %37 = vector.extract_strided_slice %0 {offsets = [6, 0], sizes = [1, 128], strides = [1, 1]} : vector<9x128xf32> to vector<1x128xf32>
    %38 = vector.broadcast %37 : vector<1x128xf32> to vector<8x128xf32>
    %39 = arith.mulf %36, %38 : vector<8x128xf32>
    %c120_i32 = arith.constant 120 : i32
    %40 = tpu.dynamic_rotate %15 by %c120_i32 dim 1 : vector<8x128xf32>, i32 -> vector<8x128xf32>
    %41 = vector.extract_strided_slice %0 {offsets = [7, 0], sizes = [1, 128], strides = [1, 1]} : vector<9x128xf32> to vector<1x128xf32>
    %42 = vector.broadcast %41 : vector<1x128xf32> to vector<8x128xf32>
    %43 = arith.mulf %40, %42 : vector<8x128xf32>
    %c119_i32 = arith.constant 119 : i32
    %44 = tpu.dynamic_rotate %15 by %c119_i32 dim 1 : vector<8x128xf32>, i32 -> vector<8x128xf32>
    %45 = vector.extract_strided_slice %0 {offsets = [8, 0], sizes = [1, 128], strides = [1, 1]} : vector<9x128xf32> to vector<1x128xf32>
    %46 = vector.broadcast %45 : vector<1x128xf32> to vector<8x128xf32>
    %47 = arith.mulf %44, %46 : vector<8x128xf32>
    %48 = tpu.concatenate %19, %23, %27, %31, %15, %35, %39, %43, %47 in 0 : vector<8x128xf32>, vector<8x128xf32>, vector<8x128xf32>, vector<8x128xf32>, vector<8x128xf32>, vector<8x128xf32>, vector<8x128xf32>, vector<8x128xf32>, vector<8x128xf32> -> vector<72x128xf32>
    %49 = arith.truncf %48 : vector<72x128xf32> to vector<72x128xbf16>
    %cst = arith.constant dense<0.000000e+00> : vector<8x128xf32>
    %50 = tpu.matmul %1, %49, %cst {dimension_numbers = #tpu.dot_dimension_numbers<[1], [0], [0], [1], [0, 0, 1, 1], [], []>} : vector<8x72xbf16>, vector<72x128xbf16>, vector<8x128xf32> -> vector<8x128xf32>
    %51 = vector.broadcast %2 : vector<8x1xf32> to vector<8x128xf32>
    %52 = arith.addf %50, %51 : vector<8x128xf32>
    %cst_28 = arith.constant dense<0.000000e+00> : vector<8xf32>
    %53 = vector.multi_reduction <add>, %52, %cst_28 [1] : vector<8x128xf32> to vector<8xf32>
    %54 = vector.shape_cast %53 : vector<8xf32> to vector<8x1xf32>
    %cst_29 = arith.constant 7.812500e-03 : f32
    %55 = vector.broadcast %cst_29 : f32 to vector<8x1xf32>
    %56 = arith.mulf %54, %55 : vector<8x1xf32>
    %57 = arith.mulf %52, %52 : vector<8x128xf32>
    %cst_30 = arith.constant dense<0.000000e+00> : vector<8xf32>
    %58 = vector.multi_reduction <add>, %57, %cst_30 [1] : vector<8x128xf32> to vector<8xf32>
    %59 = vector.shape_cast %58 : vector<8xf32> to vector<8x1xf32>
    %cst_31 = arith.constant 7.812500e-03 : f32
    %60 = vector.broadcast %cst_31 : f32 to vector<8x1xf32>
    %61 = arith.mulf %59, %60 : vector<8x1xf32>
    %62 = arith.mulf %56, %56 : vector<8x1xf32>
    %63 = arith.subf %61, %62 : vector<8x1xf32>
    %cst_32 = arith.constant 0.000000e+00 : f32
    %64 = vector.broadcast %cst_32 : f32 to vector<8x1xf32>
    %65 = arith.maximumf %63, %64 : vector<8x1xf32>
    %cst_33 = arith.constant 9.99999974E-6 : f32
    %66 = vector.broadcast %cst_33 : f32 to vector<8x1xf32>
    %67 = arith.addf %65, %66 : vector<8x1xf32>
    %68 = math.rsqrt %67 : vector<8x1xf32>
    %69 = arith.mulf %68, %3 : vector<8x1xf32>
    %70 = arith.mulf %56, %69 : vector<8x1xf32>
    %71 = arith.subf %4, %70 : vector<8x1xf32>
    %72 = vector.broadcast %69 : vector<8x1xf32> to vector<8x128xf32>
    %73 = arith.mulf %52, %72 : vector<8x128xf32>
    %74 = vector.broadcast %71 : vector<8x1xf32> to vector<8x128xf32>
    %75 = arith.addf %73, %74 : vector<8x128xf32>
    %cst_34 = arith.constant 0.000000e+00 : f32
    %76 = vector.broadcast %cst_34 : f32 to vector<8x128xf32>
    %77 = arith.maximumf %75, %76 : vector<8x128xf32>
    %c0_35 = arith.constant 0 : index
    %c0_36 = arith.constant 0 : index
    %78 = vector.load %arg17[%c0_35, %c0_36] : memref<8x128xf32, #tpu.memory_space<vmem>>, vector<8x128xf32>
    tpu.vector_store %arg17[%c0_35, %c0_36], %77 {strides = array<i32>} : memref<8x128xf32, #tpu.memory_space<vmem>>, vector<8x128xf32>,
    %c0_37 = arith.constant 0 : index
    %c0_38 = arith.constant 0 : index
    %79 = vector.load %arg15[%c0_37, %c0_38] : memref<1x128xf32, #tpu.memory_space<vmem>>, vector<1x128xf32>
    %80 = vector.extract_strided_slice %77 {offsets = [0, 0], sizes = [1, 64], strides = [1, 1]} : vector<8x128xf32> to vector<1x64xf32>
    %81 = arith.truncf %80 : vector<1x64xf32> to vector<1x64xbf16>
    %c0_39 = arith.constant 0 : index
    %c0_40 = arith.constant 0 : index
    %82 = vector.load %arg14[%c0_39, %c0_40] : memref<512x128xbf16, #tpu.memory_space<vmem>>, vector<64x128xbf16>
    %cst_41 = arith.constant dense<0.000000e+00> : vector<1x128xf32>
    %83 = tpu.matmul %81, %82, %cst_41 {dimension_numbers = #tpu.dot_dimension_numbers<[1], [0], [0], [1], [0, 0, 1, 1], [], []>} : vector<1x64xbf16>, vector<64x128xbf16>, vector<1x128xf32> -> vector<1x128xf32>
    %84 = arith.addf %79, %83 : vector<1x128xf32>
    %85 = vector.extract_strided_slice %77 {offsets = [1, 0], sizes = [1, 64], strides = [1, 1]} : vector<8x128xf32> to vector<1x64xf32>
    %86 = arith.truncf %85 : vector<1x64xf32> to vector<1x64xbf16>
    %c64 = arith.constant 64 : index
    %c0_42 = arith.constant 0 : index
    %87 = vector.load %arg14[%c64, %c0_42] : memref<512x128xbf16, #tpu.memory_space<vmem>>, vector<64x128xbf16>
    %cst_43 = arith.constant dense<0.000000e+00> : vector<1x128xf32>
    %88 = tpu.matmul %86, %87, %cst_43 {dimension_numbers = #tpu.dot_dimension_numbers<[1], [0], [0], [1], [0, 0, 1, 1], [], []>} : vector<1x64xbf16>, vector<64x128xbf16>, vector<1x128xf32> -> vector<1x128xf32>
    %89 = arith.addf %84, %88 : vector<1x128xf32>
    %90 = vector.extract_strided_slice %77 {offsets = [2, 0], sizes = [1, 64], strides = [1, 1]} : vector<8x128xf32> to vector<1x64xf32>
    %91 = arith.truncf %90 : vector<1x64xf32> to vector<1x64xbf16>
    %c128 = arith.constant 128 : index
    %c0_44 = arith.constant 0 : index
    %92 = vector.load %arg14[%c128, %c0_44] : memref<512x128xbf16, #tpu.memory_space<vmem>>, vector<64x128xbf16>
    %cst_45 = arith.constant dense<0.000000e+00> : vector<1x128xf32>
    %93 = tpu.matmul %91, %92, %cst_45 {dimension_numbers = #tpu.dot_dimension_numbers<[1], [0], [0], [1], [0, 0, 1, 1], [], []>} : vector<1x64xbf16>, vector<64x128xbf16>, vector<1x128xf32> -> vector<1x128xf32>
    %94 = arith.addf %89, %93 : vector<1x128xf32>
    %95 = vector.extract_strided_slice %77 {offsets = [3, 0], sizes = [1, 64], strides = [1, 1]} : vector<8x128xf32> to vector<1x64xf32>
    %96 = arith.truncf %95 : vector<1x64xf32> to vector<1x64xbf16>
    %c192 = arith.constant 192 : index
    %c0_46 = arith.constant 0 : index
    %97 = vector.load %arg14[%c192, %c0_46] : memref<512x128xbf16, #tpu.memory_space<vmem>>, vector<64x128xbf16>
    %cst_47 = arith.constant dense<0.000000e+00> : vector<1x128xf32>
    %98 = tpu.matmul %96, %97, %cst_47 {dimension_numbers = #tpu.dot_dimension_numbers<[1], [0], [0], [1], [0, 0, 1, 1], [], []>} : vector<1x64xbf16>, vector<64x128xbf16>, vector<1x128xf32> -> vector<1x128xf32>
    %99 = arith.addf %94, %98 : vector<1x128xf32>
    %100 = vector.extract_strided_slice %77 {offsets = [4, 0], sizes = [1, 64], strides = [1, 1]} : vector<8x128xf32> to vector<1x64xf32>
    %101 = arith.truncf %100 : vector<1x64xf32> to vector<1x64xbf16>
    %c256 = arith.constant 256 : index
    %c0_48 = arith.constant 0 : index
    %102 = vector.load %arg14[%c256, %c0_48] : memref<512x128xbf16, #tpu.memory_space<vmem>>, vector<64x128xbf16>
    %cst_49 = arith.constant dense<0.000000e+00> : vector<1x128xf32>
    %103 = tpu.matmul %101, %102, %cst_49 {dimension_numbers = #tpu.dot_dimension_numbers<[1], [0], [0], [1], [0, 0, 1, 1], [], []>} : vector<1x64xbf16>, vector<64x128xbf16>, vector<1x128xf32> -> vector<1x128xf32>
    %104 = arith.addf %99, %103 : vector<1x128xf32>
    %105 = vector.extract_strided_slice %77 {offsets = [5, 0], sizes = [1, 64], strides = [1, 1]} : vector<8x128xf32> to vector<1x64xf32>
    %106 = arith.truncf %105 : vector<1x64xf32> to vector<1x64xbf16>
    %c320 = arith.constant 320 : index
    %c0_50 = arith.constant 0 : index
    %107 = vector.load %arg14[%c320, %c0_50] : memref<512x128xbf16, #tpu.memory_space<vmem>>, vector<64x128xbf16>
    %cst_51 = arith.constant dense<0.000000e+00> : vector<1x128xf32>
    %108 = tpu.matmul %106, %107, %cst_51 {dimension_numbers = #tpu.dot_dimension_numbers<[1], [0], [0], [1], [0, 0, 1, 1], [], []>} : vector<1x64xbf16>, vector<64x128xbf16>, vector<1x128xf32> -> vector<1x128xf32>
    %109 = arith.addf %104, %108 : vector<1x128xf32>
    %110 = vector.extract_strided_slice %77 {offsets = [6, 0], sizes = [1, 64], strides = [1, 1]} : vector<8x128xf32> to vector<1x64xf32>
    %111 = arith.truncf %110 : vector<1x64xf32> to vector<1x64xbf16>
    %c384 = arith.constant 384 : index
    %c0_52 = arith.constant 0 : index
    %112 = vector.load %arg14[%c384, %c0_52] : memref<512x128xbf16, #tpu.memory_space<vmem>>, vector<64x128xbf16>
    %cst_53 = arith.constant dense<0.000000e+00> : vector<1x128xf32>
    %113 = tpu.matmul %111, %112, %cst_53 {dimension_numbers = #tpu.dot_dimension_numbers<[1], [0], [0], [1], [0, 0, 1, 1], [], []>} : vector<1x64xbf16>, vector<64x128xbf16>, vector<1x128xf32> -> vector<1x128xf32>
    %114 = arith.addf %109, %113 : vector<1x128xf32>
    %115 = vector.extract_strided_slice %77 {offsets = [7, 0], sizes = [1, 64], strides = [1, 1]} : vector<8x128xf32> to vector<1x64xf32>
    %116 = arith.truncf %115 : vector<1x64xf32> to vector<1x64xbf16>
    %c448 = arith.constant 448 : index
    %c0_54 = arith.constant 0 : index
    %117 = vector.load %arg14[%c448, %c0_54] : memref<512x128xbf16, #tpu.memory_space<vmem>>, vector<64x128xbf16>
    %cst_55 = arith.constant dense<0.000000e+00> : vector<1x128xf32>
    %118 = tpu.matmul %116, %117, %cst_55 {dimension_numbers = #tpu.dot_dimension_numbers<[1], [0], [0], [1], [0, 0, 1, 1], [], []>} : vector<1x64xbf16>, vector<64x128xbf16>, vector<1x128xf32> -> vector<1x128xf32>
    %119 = arith.addf %114, %118 : vector<1x128xf32>
    %c0_56 = arith.constant 0 : index
    %c0_57 = arith.constant 0 : index
    %120 = vector.load %arg16[%c0_56, %c0_57] : memref<2x128xf32, #tpu.memory_space<vmem>>, vector<1x128xf32>
    tpu.vector_store %arg16[%c0_56, %c0_57], %119 {strides = array<i32>} : memref<2x128xf32, #tpu.memory_space<vmem>>, vector<1x128xf32>,
    %121 = vector.extract_strided_slice %77 {offsets = [0, 64], sizes = [1, 64], strides = [1, 1]} : vector<8x128xf32> to vector<1x64xf32>
    %122 = arith.truncf %121 : vector<1x64xf32> to vector<1x64xbf16>
    %c0_58 = arith.constant 0 : index
    %c0_59 = arith.constant 0 : index
    %123 = vector.load %arg14[%c0_58, %c0_59] : memref<512x128xbf16, #tpu.memory_space<vmem>>, vector<64x128xbf16>
    %cst_60 = arith.constant dense<0.000000e+00> : vector<1x128xf32>
    %124 = tpu.matmul %122, %123, %cst_60 {dimension_numbers = #tpu.dot_dimension_numbers<[1], [0], [0], [1], [0, 0, 1, 1], [], []>} : vector<1x64xbf16>, vector<64x128xbf16>, vector<1x128xf32> -> vector<1x128xf32>
    %125 = arith.addf %79, %124 : vector<1x128xf32>
    %126 = vector.extract_strided_slice %77 {offsets = [1, 64], sizes = [1, 64], strides = [1, 1]} : vector<8x128xf32> to vector<1x64xf32>
    %127 = arith.truncf %126 : vector<1x64xf32> to vector<1x64xbf16>
    %c64_61 = arith.constant 64 : index
    %c0_62 = arith.constant 0 : index
    %128 = vector.load %arg14[%c64_61, %c0_62] : memref<512x128xbf16, #tpu.memory_space<vmem>>, vector<64x128xbf16>
    %cst_63 = arith.constant dense<0.000000e+00> : vector<1x128xf32>
    %129 = tpu.matmul %127, %128, %cst_63 {dimension_numbers = #tpu.dot_dimension_numbers<[1], [0], [0], [1], [0, 0, 1, 1], [], []>} : vector<1x64xbf16>, vector<64x128xbf16>, vector<1x128xf32> -> vector<1x128xf32>
    %130 = arith.addf %125, %129 : vector<1x128xf32>
    %131 = vector.extract_strided_slice %77 {offsets = [2, 64], sizes = [1, 64], strides = [1, 1]} : vector<8x128xf32> to vector<1x64xf32>
    %132 = arith.truncf %131 : vector<1x64xf32> to vector<1x64xbf16>
    %c128_64 = arith.constant 128 : index
    %c0_65 = arith.constant 0 : index
    %133 = vector.load %arg14[%c128_64, %c0_65] : memref<512x128xbf16, #tpu.memory_space<vmem>>, vector<64x128xbf16>
    %cst_66 = arith.constant dense<0.000000e+00> : vector<1x128xf32>
    %134 = tpu.matmul %132, %133, %cst_66 {dimension_numbers = #tpu.dot_dimension_numbers<[1], [0], [0], [1], [0, 0, 1, 1], [], []>} : vector<1x64xbf16>, vector<64x128xbf16>, vector<1x128xf32> -> vector<1x128xf32>
    %135 = arith.addf %130, %134 : vector<1x128xf32>
    %136 = vector.extract_strided_slice %77 {offsets = [3, 64], sizes = [1, 64], strides = [1, 1]} : vector<8x128xf32> to vector<1x64xf32>
    %137 = arith.truncf %136 : vector<1x64xf32> to vector<1x64xbf16>
    %c192_67 = arith.constant 192 : index
    %c0_68 = arith.constant 0 : index
    %138 = vector.load %arg14[%c192_67, %c0_68] : memref<512x128xbf16, #tpu.memory_space<vmem>>, vector<64x128xbf16>
    %cst_69 = arith.constant dense<0.000000e+00> : vector<1x128xf32>
    %139 = tpu.matmul %137, %138, %cst_69 {dimension_numbers = #tpu.dot_dimension_numbers<[1], [0], [0], [1], [0, 0, 1, 1], [], []>} : vector<1x64xbf16>, vector<64x128xbf16>, vector<1x128xf32> -> vector<1x128xf32>
    %140 = arith.addf %135, %139 : vector<1x128xf32>
    %141 = vector.extract_strided_slice %77 {offsets = [4, 64], sizes = [1, 64], strides = [1, 1]} : vector<8x128xf32> to vector<1x64xf32>
    %142 = arith.truncf %141 : vector<1x64xf32> to vector<1x64xbf16>
    %c256_70 = arith.constant 256 : index
    %c0_71 = arith.constant 0 : index
    %143 = vector.load %arg14[%c256_70, %c0_71] : memref<512x128xbf16, #tpu.memory_space<vmem>>, vector<64x128xbf16>
    %cst_72 = arith.constant dense<0.000000e+00> : vector<1x128xf32>
    %144 = tpu.matmul %142, %143, %cst_72 {dimension_numbers = #tpu.dot_dimension_numbers<[1], [0], [0], [1], [0, 0, 1, 1], [], []>} : vector<1x64xbf16>, vector<64x128xbf16>, vector<1x128xf32> -> vector<1x128xf32>
    %145 = arith.addf %140, %144 : vector<1x128xf32>
    %146 = vector.extract_strided_slice %77 {offsets = [5, 64], sizes = [1, 64], strides = [1, 1]} : vector<8x128xf32> to vector<1x64xf32>
    %147 = arith.truncf %146 : vector<1x64xf32> to vector<1x64xbf16>
    %c320_73 = arith.constant 320 : index
    %c0_74 = arith.constant 0 : index
    %148 = vector.load %arg14[%c320_73, %c0_74] : memref<512x128xbf16, #tpu.memory_space<vmem>>, vector<64x128xbf16>
    %cst_75 = arith.constant dense<0.000000e+00> : vector<1x128xf32>
    %149 = tpu.matmul %147, %148, %cst_75 {dimension_numbers = #tpu.dot_dimension_numbers<[1], [0], [0], [1], [0, 0, 1, 1], [], []>} : vector<1x64xbf16>, vector<64x128xbf16>, vector<1x128xf32> -> vector<1x128xf32>
    %150 = arith.addf %145, %149 : vector<1x128xf32>
    %151 = vector.extract_strided_slice %77 {offsets = [6, 64], sizes = [1, 64], strides = [1, 1]} : vector<8x128xf32> to vector<1x64xf32>
    %152 = arith.truncf %151 : vector<1x64xf32> to vector<1x64xbf16>
    %c384_76 = arith.constant 384 : index
    %c0_77 = arith.constant 0 : index
    %153 = vector.load %arg14[%c384_76, %c0_77] : memref<512x128xbf16, #tpu.memory_space<vmem>>, vector<64x128xbf16>
    %cst_78 = arith.constant dense<0.000000e+00> : vector<1x128xf32>
    %154 = tpu.matmul %152, %153, %cst_78 {dimension_numbers = #tpu.dot_dimension_numbers<[1], [0], [0], [1], [0, 0, 1, 1], [], []>} : vector<1x64xbf16>, vector<64x128xbf16>, vector<1x128xf32> -> vector<1x128xf32>
    %155 = arith.addf %150, %154 : vector<1x128xf32>
    %156 = vector.extract_strided_slice %77 {offsets = [7, 64], sizes = [1, 64], strides = [1, 1]} : vector<8x128xf32> to vector<1x64xf32>
    %157 = arith.truncf %156 : vector<1x64xf32> to vector<1x64xbf16>
    %c448_79 = arith.constant 448 : index
    %c0_80 = arith.constant 0 : index
    %158 = vector.load %arg14[%c448_79, %c0_80] : memref<512x128xbf16, #tpu.memory_space<vmem>>, vector<64x128xbf16>
    %cst_81 = arith.constant dense<0.000000e+00> : vector<1x128xf32>
    %159 = tpu.matmul %157, %158, %cst_81 {dimension_numbers = #tpu.dot_dimension_numbers<[1], [0], [0], [1], [0, 0, 1, 1], [], []>} : vector<1x64xbf16>, vector<64x128xbf16>, vector<1x128xf32> -> vector<1x128xf32>
    %160 = arith.addf %155, %159 : vector<1x128xf32>
    %c1 = arith.constant 1 : index
    %c0_82 = arith.constant 0 : index
    %161 = vector.load %arg16[%c1, %c0_82] : memref<2x128xf32, #tpu.memory_space<vmem>>, vector<1x128xf32>
    tpu.vector_store %arg16[%c1, %c0_82], %160 {strides = array<i32>} : memref<2x128xf32, #tpu.memory_space<vmem>>, vector<1x128xf32>,
    return
  }
}

</mosaic_0001>

<llo_original>
// kernel: aam_forward.1
$region0: #{aam_forward.1}
  #allocation0 [shape = 'u32[]', space=smem, size = 0x4, offset = 0x4, fixed_abs, tag = 'smem constant byte address 0x4 - core index']
  #allocation1 [shape = 'u32[144,128]{1,0:T(1,128)}', space=vmem, size = 0x12000, scoped, tag = 'internal scratch']
  %s0 = inlined_call_operand.vmem [shape: f32[8,128], index: 0, kind: input, shape index: {}]
  %s1 = inlined_call_operand.vmem [shape: f32[9,128], index: 1, kind: input, shape index: {}]
  %s2 = inlined_call_operand.vmem [shape: bf16[8,72], index: 2, kind: input, shape index: {}]
  %s3 = inlined_call_operand.vmem [shape: f32[8,1], index: 3, kind: input, shape index: {}]
  %s4 = inlined_call_operand.vmem [shape: f32[8,1], index: 4, kind: input, shape index: {}]
  %s5 = inlined_call_operand.vmem [shape: f32[8,1], index: 5, kind: input, shape index: {}]
  %s6 = inlined_call_operand.vmem [shape: bf16[8,72], index: 6, kind: input, shape index: {}]
  %s7 = inlined_call_operand.vmem [shape: f32[8,1], index: 7, kind: input, shape index: {}]
  %s8 = inlined_call_operand.vmem [shape: f32[8,9], index: 8, kind: input, shape index: {}]
  %s9 = inlined_call_operand.vmem [shape: f32[8,1], index: 9, kind: input, shape index: {}]
  %s10 = inlined_call_operand.vmem [shape: f32[8,1], index: 10, kind: input, shape index: {}]
  %s11 = inlined_call_operand.vmem [shape: f32[8,1], index: 11, kind: input, shape index: {}]
  %s12 = inlined_call_operand.vmem [shape: f32[8,9], index: 12, kind: input, shape index: {}]
  %s13 = inlined_call_operand.vmem [shape: f32[8,1], index: 13, kind: input, shape index: {}]
  %s14 = inlined_call_operand.vmem [shape: bf16[512,128], index: 14, kind: input, shape index: {}]
  %s15 = inlined_call_operand.vmem [shape: f32[1,128], index: 15, kind: input, shape index: {}]
  %s16 = inlined_call_operand.hbm [shape: f32[2,128], index: 16, kind: output, shape index: {0}]
  %s17 = inlined_call_operand.vmem [shape: f32[8,128], index: 17, kind: output, shape index: {1}]
  %18 = xla_tuple %s16, %s17
  %s19 = sld [smem:[#allocation0]]
  $region89: #{aam_forward.1} parent=0
    _
  %s21 = ssub.s32 1, %s19
  %s22 = scalar_select 0, %s21, %s19
  $region1: #{aam_forward.1} parent=0
    #allocation2 [shape = 'u8[1024]{0}', space=vmem, size = 0x400, scoped, tag = 'output window, operand 0, single buffered']
    #allocation3 [shape = 's32[1]{0}', space=sflag, size = 0x4, scoped, tag = 'scoped memory for aam_forward.1']
    %23 = vsyncpa [#allocation3], 0
    // Predicated region
    $region2: #{aam_forward.1} parent=1 // pred_check
      _
    $region3: #{aam_forward.1} parent=1 // pred_check_branch
      %25 = sbr.rel (0) target = $region5
    $region4: #{aam_forward.1} parent=1 // pred_region
      _
    $region5: #{aam_forward.1} parent=1 // pred_fallthru
      _
    // Predicated region
    $region6: #{aam_forward.1} parent=1 // pred_check
      _
    $region7: #{aam_forward.1} parent=1 // pred_check_branch
      %27 = sbr.rel (0) target = $region9
    $region8: #{aam_forward.1} parent=1 // pred_region
      _
    $region9: #{aam_forward.1} parent=1 // pred_fallthru
      _
    // Predicated region
    $region10: #{aam_forward.1} parent=1 // pred_check
      _
    $region11: #{aam_forward.1} parent=1 // pred_check_branch
      %29 = sbr.rel (0) target = $region13
    $region12: #{aam_forward.1} parent=1 // pred_region
      _
    $region13: #{aam_forward.1} parent=1 // pred_fallthru
      _
    // Predicated region
    $region14: #{aam_forward.1} parent=1 // pred_check
      _
    $region15: #{aam_forward.1} parent=1 // pred_check_branch
      %31 = sbr.rel (0) target = $region17
    $region16: #{aam_forward.1} parent=1 // pred_region
      _
    $region17: #{aam_forward.1} parent=1 // pred_fallthru
      _
    // Predicated region
    $region18: #{aam_forward.1} parent=1 // pred_check
      _
    $region19: #{aam_forward.1} parent=1 // pred_check_branch
      %33 = sbr.rel (0) target = $region21
    $region20: #{aam_forward.1} parent=1 // pred_region
      _
    $region21: #{aam_forward.1} parent=1 // pred_fallthru
      _
    // Predicated region
    $region22: #{aam_forward.1} parent=1 // pred_check
      _
    $region23: #{aam_forward.1} parent=1 // pred_check_branch
      %35 = sbr.rel (0) target = $region25
    $region24: #{aam_forward.1} parent=1 // pred_region
      _
    $region25: #{aam_forward.1} parent=1 // pred_fallthru
      _
    // Predicated region
    $region26: #{aam_forward.1} parent=1 // pred_check
      _
    $region27: #{aam_forward.1} parent=1 // pred_check_branch
      %37 = sbr.rel (0) target = $region29
    $region28: #{aam_forward.1} parent=1 // pred_region
      _
    $region29: #{aam_forward.1} parent=1 // pred_fallthru
      _
    // Predicated region
    $region30: #{aam_forward.1} parent=1 // pred_check
      _
    $region31: #{aam_forward.1} parent=1 // pred_check_branch
      %39 = sbr.rel (0) target = $region33
    $region32: #{aam_forward.1} parent=1 // pred_region
      _
    $region33: #{aam_forward.1} parent=1 // pred_fallthru
      _
    // Predicated region
    $region34: #{aam_forward.1} parent=1 // pred_check
      _
    $region35: #{aam_forward.1} parent=1 // pred_check_branch
      %41 = sbr.rel (0) target = $region37
    $region36: #{aam_forward.1} parent=1 // pred_region
      _
    $region37: #{aam_forward.1} parent=1 // pred_fallthru
      _
    // Predicated region
    $region38: #{aam_forward.1} parent=1 // pred_check
      _
    $region39: #{aam_forward.1} parent=1 // pred_check_branch
      %43 = sbr.rel (0) target = $region41
    $region40: #{aam_forward.1} parent=1 // pred_region
      _
    $region41: #{aam_forward.1} parent=1 // pred_fallthru
      _
    // Predicated region
    $region42: #{aam_forward.1} parent=1 // pred_check
      _
    $region43: #{aam_forward.1} parent=1 // pred_check_branch
      %45 = sbr.rel (0) target = $region45
    $region44: #{aam_forward.1} parent=1 // pred_region
      _
    $region45: #{aam_forward.1} parent=1 // pred_fallthru
      _
    // Predicated region
    $region46: #{aam_forward.1} parent=1 // pred_check
      _
    $region47: #{aam_forward.1} parent=1 // pred_check_branch
      %47 = sbr.rel (0) target = $region49
    $region48: #{aam_forward.1} parent=1 // pred_region
      _
    $region49: #{aam_forward.1} parent=1 // pred_fallthru
      _
    // Predicated region
    $region50: #{aam_forward.1} parent=1 // pred_check
      _
    $region51: #{aam_forward.1} parent=1 // pred_check_branch
      %49 = sbr.rel (0) target = $region53
    $region52: #{aam_forward.1} parent=1 // pred_region
      _
    $region53: #{aam_forward.1} parent=1 // pred_fallthru
      _
    // Predicated region
    $region54: #{aam_forward.1} parent=1 // pred_check
      _
    $region55: #{aam_forward.1} parent=1 // pred_check_branch
      %51 = sbr.rel (0) target = $region57
    $region56: #{aam_forward.1} parent=1 // pred_region
      _
    $region57: #{aam_forward.1} parent=1 // pred_fallthru
      _
    // Predicated region
    $region58: #{aam_forward.1} parent=1 // pred_check
      _
    $region59: #{aam_forward.1} parent=1 // pred_check_branch
      %53 = sbr.rel (0) target = $region61
    $region60: #{aam_forward.1} parent=1 // pred_region
      _
    $region61: #{aam_forward.1} parent=1 // pred_fallthru
      _
    // Predicated region
    $region62: #{aam_forward.1} parent=1 // pred_check
      _
    $region63: #{aam_forward.1} parent=1 // pred_check_branch
      %55 = sbr.rel (0) target = $region65
    $region64: #{aam_forward.1} parent=1 // pred_region
      _
    $region65: #{aam_forward.1} parent=1 // pred_fallthru
      _
    %v57 = vld [vmem:[%s1] sm:$0xff]
    %v58 = vld [vmem:[%s1 + $0x8] sm:$0x1]
    %v59 = vld [vmem:[%s2] sm:$0xf]
    %v60 = vld [vmem:[%s3] sm:$0xff]
    %v61 = vld [vmem:[%s4] sm:$0xff]
    %v62 = vld [vmem:[%s5] sm:$0xff]
    %v63 = vld [vmem:[%s6] sm:$0xf]
    %v64 = vld [vmem:[%s7] sm:$0xff]
    %v65 = vld [vmem:[%s8] sm:$0xff]
    %v66 = vld [vmem:[%s9] sm:$0xff]
    %v67 = vld [vmem:[%s10] sm:$0xff]
    %v68 = vld [vmem:[%s11] sm:$0xff]
    %v69 = vld [vmem:[%s12] sm:$0xff]
    %v70 = vld [vmem:[%s13] sm:$0xff]
    %v71 = vld [vmem:[%s0] sm:$0xff]
    loop: start=0, step=1, limit=3
    $region66: #{aam_forward.1} parent=1 // loop_pre_header
      _
    $region67: #{aam_forward.1} parent=1 // loop_header
      %s73 = sphi 0, %s77
      %p74 = scmp.ge.s32.totalorder %s73, 3
      %v78 = vphi %v71, %v502
    $region68: #{aam_forward.1} parent=1 // loop_header_branch
      %76 = sbr.rel (%p74) target = $region72
    $region69: #{aam_forward.1} parent=1 // loop_body
      %79 = vrot.lane.b32.xlu0 %v78, 9
      %v80 = vpop.permute.xlu0 %79
      %v81 = vlaneseq
      %v82 = vshrl.u32 %v81, 7
      %v83 = vsub.s32 0, %v82
      %v84 = vrot.slane %v57, %v83
      %v85 = vmul.f32 %v80, %v84
      %86 = vrot.lane.b32.xlu0 %v78, 8
      %v87 = vpop.permute.xlu0 %86
      %v88 = vlaneseq
      %v89 = vshrl.u32 %v88, 7
      %v90 = vsub.s32 1, %v89
      %v91 = vrot.slane %v57, %v90
      %v92 = vmul.f32 %v87, %v91
      %93 = vrot.lane.b32.xlu0 %v78, 7
      %v94 = vpop.permute.xlu0 %93
      %v95 = vlaneseq
      %v96 = vshrl.u32 %v95, 7
      %v97 = vsub.s32 2, %v96
      %v98 = vrot.slane %v57, %v97
      %v99 = vmul.f32 %v94, %v98
      %100 = vrot.lane.b32.xlu0 %v78, 1
      %v101 = vpop.permute.xlu0 %100
      %v102 = vlaneseq
      %v103 = vshrl.u32 %v102, 7
      %v104 = vsub.s32 3, %v103
      %v105 = vrot.slane %v57, %v104
      %v106 = vmul.f32 %v101, %v105
      %107 = vrot.lane.b32.xlu0 %v78, 127
      %v108 = vpop.permute.xlu0 %107
      %v109 = vlaneseq
      %v110 = vshrl.u32 %v109, 7
      %v111 = vsub.s32 5, %v110
      %v112 = vrot.slane %v57, %v111
      %v113 = vmul.f32 %v108, %v112
      %114 = vrot.lane.b32.xlu0 %v78, 121
      %v115 = vpop.permute.xlu0 %114
      %v116 = vlaneseq
      %v117 = vshrl.u32 %v116, 7
      %v118 = vsub.s32 6, %v117
      %v119 = vrot.slane %v57, %v118
      %v120 = vmul.f32 %v115, %v119
      %121 = vrot.lane.b32.xlu0 %v78, 120
      %v122 = vpop.permute.xlu0 %121
      %v123 = vlaneseq
      %v124 = vshrl.u32 %v123, 7
      %v125 = vsub.s32 7, %v124
      %v126 = vrot.slane %v57, %v125
      %v127 = vmul.f32 %v122, %v126
      %128 = vrot.lane.b32.xlu0 %v78, 119
      %v129 = vpop.permute.xlu0 %128
      %v130 = vlaneseq
      %v131 = vshrl.u32 %v130, 7
      %v132 = vsub.s32 0, %v131
      %v133 = vrot.slane %v58, %v132
      %v134 = vmul.f32 %v129, %v133
      %v135 = vpack.c.bf16 %v92, %v85
      %v136 = vpack.c.bf16 %v106, %v99
      %v137 = vpack.c.bf16 %v113, %v78
      %v138 = vpack.c.bf16 %v127, %v120
      %v139 = vpack.c.bf16 %v134, %v134
      %141 = vset.pattern.permute.xlu0 0
      %142 = vperm.xlu0 %141, %v60
      %v143 = vpop.permute.xlu0 %142
      %vm145 = vcmask 588800
      %v147 = vsel %vm145, %v59, 0
      %vm149 = vcmask 1043456
      %v151 = vsel %vm149, %v139, 0
      %153 = vmatprep.subr.bf16.mxu0 0
      %154 = vmatpush1.bf16.msra.mxu0 %v135
      %155 = vmatprep.subr.bf16.mxu0 0
      %156 = vmatpush1.bf16.msra.mxu0 %v136
      %157 = vmatprep.subr.bf16.mxu0 0
      %158 = vmatpush1.bf16.msra.mxu0 %v137
      %159 = vmatprep.subr.bf16.mxu0 0
      %160 = vmatpush1.bf16.msra.mxu0 %v138
      %161 = vmatprep.subr.bf16.mxu0 0
      %162 = vmatpush1.bf16.msra.mxu0 %v151
      %163 = vmatprep.subr.bf16.mxu0 0
      %164 = vmatpush1.bf16.msra.mxu0 0
      %165 = vmatprep.subr.bf16.mxu0 0
      %166 = vmatpush1.bf16.msra.mxu0 0
      %167 = vmatprep.subr.bf16.mxu0 0
      %168 = vmatpush1.bf16.msra.mxu0 0
      %169 = vmatprep.subr.bf16.mxu0 0
      %170 = vmatpush1.bf16.msra.mxu0 0
      %171 = vmatprep.subr.bf16.mxu0 0
      %172 = vmatpush1.bf16.msra.mxu0 0
      %173 = vmatprep.subr.bf16.mxu0 0
      %174 = vmatpush1.bf16.msra.mxu0 0
      %175 = vmatprep.subr.bf16.mxu0 0
      %176 = vmatpush1.bf16.msra.mxu0 0
      %177 = vmatprep.subr.bf16.mxu0 0
      %178 = vmatpush1.bf16.msra.mxu0 0
      %179 = vmatprep.subr.bf16.mxu0 0
      %180 = vmatpush1.bf16.msra.mxu0 0
      %181 = vmatprep.subr.bf16.mxu0 0
      %182 = vmatpush1.bf16.msra.mxu0 0
      %183 = vmatprep.subr.bf16.mxu0 0
      %184 = vmatpush1.bf16.msra.mxu0 0
      %185 = vmatprep.mubr.bf16.mxu0 0
      %186 = vmatmul.mubr.bf16.gmra.mrb[0].mxu0 %v147
      %v187 = vpop.f32.mrb[0].mxu0
      %v188 = vadd.f32 %v143, %v187
      %v189 = vpop.f32.mrb[0].mxu0
      %v190 = vpop.f32.mrb[0].mxu0
      %v191 = vpop.f32.mrb[0].mxu0
      %192 = vdwg.mxu0
      %193 = vadd.xlane.f32.xlu0 %v188
      %v194 = vpop.xlane.xlu0 %193
      %v195 = vmul.f32 %v194, 0.0078125
      %v196 = vmul.f32 %v188, %v188
      %197 = vadd.xlane.f32.xlu0 %v196
      %v198 = vpop.xlane.xlu0 %197
      %v199 = vmul.f32 %v198, 0.0078125
      %v200 = vmul.f32 %v195, %v195
      %v201 = vsub.f32 %v199, %v200
      %v202 = vmax.f32 %v201, 0.0
      %v203 = vadd.f32 %v202, 1e-05
      %v204 = vrsqrt.pop %v203
      %v205 = vmul.f32 %v204, %v61
      %v206 = vmul.f32 %v195, %v205
      %v207 = vsub.f32 %v62, %v206
      %209 = vset.pattern.permute.xlu0 0
      %210 = vperm.xlu0 %209, %v205
      %v211 = vpop.permute.xlu0 %210
      %v213 = vmul.f32 %v188, %v211
      %215 = vset.pattern.permute.xlu0 0
      %216 = vperm.xlu0 %215, %v207
      %v217 = vpop.permute.xlu0 %216
      %v219 = vadd.f32 %v213, %v217
      %v220 = vmax.f32 %v219, 0.0
      %221 = vrot.lane.b32.xlu0 %v220, 9
      %v222 = vpop.permute.xlu0 %221
      %v223 = vmul.f32 %v222, %v84
      %224 = vrot.lane.b32.xlu0 %v220, 8
      %v225 = vpop.permute.xlu0 %224
      %v226 = vmul.f32 %v225, %v91
      %227 = vrot.lane.b32.xlu0 %v220, 7
      %v228 = vpop.permute.xlu0 %227
      %v229 = vmul.f32 %v228, %v98
      %230 = vrot.lane.b32.xlu0 %v220, 1
      %v231 = vpop.permute.xlu0 %230
      %v232 = vmul.f32 %v231, %v105
      %233 = vrot.lane.b32.xlu0 %v220, 127
      %v234 = vpop.permute.xlu0 %233
      %v235 = vmul.f32 %v234, %v112
      %236 = vrot.lane.b32.xlu0 %v220, 121
      %v237 = vpop.permute.xlu0 %236
      %v238 = vmul.f32 %v237, %v119
      %239 = vrot.lane.b32.xlu0 %v220, 120
      %v240 = vpop.permute.xlu0 %239
      %v241 = vmul.f32 %v240, %v126
      %242 = vrot.lane.b32.xlu0 %v220, 119
      %v243 = vpop.permute.xlu0 %242
      %v244 = vmul.f32 %v243, %v133
      %v245 = vpack.c.bf16 %v226, %v223
      %v246 = vpack.c.bf16 %v232, %v229
      %v247 = vpack.c.bf16 %v235, %v220
      %v248 = vpack.c.bf16 %v241, %v238
      %v249 = vpack.c.bf16 %v244, %v244
      %251 = vset.pattern.permute.xlu0 0
      %252 = vperm.xlu0 %251, %v64
      %v253 = vpop.permute.xlu0 %252
      %v256 = vsel %vm145, %v63, 0
      %v259 = vsel %vm149, %v249, 0
      %261 = vmatprep.subr.bf16.mxu0 0
      %262 = vmatpush1.bf16.msra.mxu0 %v245
      %263 = vmatprep.subr.bf16.mxu0 0
      %264 = vmatpush1.bf16.msra.mxu0 %v246
      %265 = vmatprep.subr.bf16.mxu0 0
      %266 = vmatpush1.bf16.msra.mxu0 %v247
      %267 = vmatprep.subr.bf16.mxu0 0
      %268 = vmatpush1.bf16.msra.mxu0 %v248
      %269 = vmatprep.subr.bf16.mxu0 0
      %270 = vmatpush1.bf16.msra.mxu0 %v259
      %271 = vmatprep.subr.bf16.mxu0 0
      %272 = vmatpush1.bf16.msra.mxu0 0
      %273 = vmatprep.subr.bf16.mxu0 0
      %274 = vmatpush1.bf16.msra.mxu0 0
      %275 = vmatprep.subr.bf16.mxu0 0
      %276 = vmatpush1.bf16.msra.mxu0 0
      %277 = vmatprep.subr.bf16.mxu0 0
      %278 = vmatpush1.bf16.msra.mxu0 0
      %279 = vmatprep.subr.bf16.mxu0 0
      %280 = vmatpush1.bf16.msra.mxu0 0
      %281 = vmatprep.subr.bf16.mxu0 0
      %282 = vmatpush1.bf16.msra.mxu0 0
      %283 = vmatprep.subr.bf16.mxu0 0
      %284 = vmatpush1.bf16.msra.mxu0 0
      %285 = vmatprep.subr.bf16.mxu0 0
      %286 = vmatpush1.bf16.msra.mxu0 0
      %287 = vmatprep.subr.bf16.mxu0 0
      %288 = vmatpush1.bf16.msra.mxu0 0
      %289 = vmatprep.subr.bf16.mxu0 0
      %290 = vmatpush1.bf16.msra.mxu0 0
      %291 = vmatprep.subr.bf16.mxu0 0
      %292 = vmatpush1.bf16.msra.mxu0 0
      %293 = vmatprep.mubr.bf16.mxu0 0
      %294 = vmatmul.mubr.bf16.gmra.mrb[0].mxu0 %v256
      %v295 = vpop.f32.mrb[0].mxu0
      %v296 = vadd.f32 %v253, %v295
      %v297 = vpop.f32.mrb[0].mxu0
      %v298 = vpop.f32.mrb[0].mxu0
      %v299 = vpop.f32.mrb[0].mxu0
      %300 = vdwg.mxu0
      %v301 = vmul.f32 %v296, 0.5
      %v302 = vtanh.pop %v301
      %v303 = vadd.f32 %v302, 1.0
      %v304 = vmul.f32 %v303, 0.5
      %v305 = vmul.f32 %v296, %v304
      %306 = vrot.lane.b32.xlu0 %v305, 9
      %v307 = vpop.permute.xlu0 %306
      %v308 = vmul.f32 %v307, %v84
      %309 = vrot.lane.b32.xlu0 %v305, 8
      %v310 = vpop.permute.xlu0 %309
      %v311 = vmul.f32 %v310, %v91
      %312 = vrot.lane.b32.xlu0 %v305, 7
      %v313 = vpop.permute.xlu0 %312
      %v314 = vmul.f32 %v313, %v98
      %315 = vrot.lane.b32.xlu0 %v305, 1
      %v316 = vpop.permute.xlu0 %315
      %v317 = vmul.f32 %v316, %v105
      %318 = vrot.lane.b32.xlu0 %v305, 127
      %v319 = vpop.permute.xlu0 %318
      %v320 = vmul.f32 %v319, %v112
      %321 = vrot.lane.b32.xlu0 %v305, 121
      %v322 = vpop.permute.xlu0 %321
      %v323 = vmul.f32 %v322, %v119
      %324 = vrot.lane.b32.xlu0 %v305, 120
      %v325 = vpop.permute.xlu0 %324
      %v326 = vmul.f32 %v325, %v126
      %327 = vrot.lane.b32.xlu0 %v305, 119
      %v328 = vpop.permute.xlu0 %327
      %v329 = vmul.f32 %v328, %v133
      %331 = vset.pattern.permute.xlu0 0
      %332 = vperm.xlu0 %331, %v65
      %v333 = vpop.permute.xlu0 %332
      %v335 = vmul.f32 %v308, %v333
      %336 = vset.pattern.permute.xlu0 1
      %337 = vperm.xlu0 %336, %v65
      %v338 = vpop.permute.xlu0 %337
      %v340 = vmul.f32 %v311, %v338
      %v341 = vadd.f32 %v335, %v340
      %342 = vset.pattern.permute.xlu0 2
      %343 = vperm.xlu0 %342, %v65
      %v344 = vpop.permute.xlu0 %343
      %v346 = vmul.f32 %v314, %v344
      %v347 = vadd.f32 %v341, %v346
      %348 = vset.pattern.permute.xlu0 3
      %349 = vperm.xlu0 %348, %v65
      %v350 = vpop.permute.xlu0 %349
      %v352 = vmul.f32 %v317, %v350
      %v353 = vadd.f32 %v347, %v352
      %354 = vset.pattern.permute.xlu0 4
      %355 = vperm.xlu0 %354, %v65
      %v356 = vpop.permute.xlu0 %355
      %v358 = vmul.f32 %v305, %v356
      %v359 = vadd.f32 %v353, %v358
      %360 = vset.pattern.permute.xlu0 5
      %361 = vperm.xlu0 %360, %v65
      %v362 = vpop.permute.xlu0 %361
      %v364 = vmul.f32 %v320, %v362
      %v365 = vadd.f32 %v359, %v364
      %366 = vset.pattern.permute.xlu0 6
      %367 = vperm.xlu0 %366, %v65
      %v368 = vpop.permute.xlu0 %367
      %v370 = vmul.f32 %v323, %v368
      %v371 = vadd.f32 %v365, %v370
      %372 = vset.pattern.permute.xlu0 7
      %373 = vperm.xlu0 %372, %v65
      %v374 = vpop.permute.xlu0 %373
      %v376 = vmul.f32 %v326, %v374
      %v377 = vadd.f32 %v371, %v376
      %378 = vset.pattern.permute.xlu0 8
      %379 = vperm.xlu0 %378, %v65
      %v380 = vpop.permute.xlu0 %379
      %v382 = vmul.f32 %v329, %v380
      %v383 = vadd.f32 %v377, %v382
      %385 = vset.pattern.permute.xlu0 0
      %386 = vperm.xlu0 %385, %v66
      %v387 = vpop.permute.xlu0 %386
      %v389 = vadd.f32 %v383, %v387
      %390 = vadd.xlane.f32.xlu0 %v389
      %v391 = vpop.xlane.xlu0 %390
      %v392 = vmul.f32 %v391, 0.0078125
      %v393 = vmul.f32 %v389, %v389
      %394 = vadd.xlane.f32.xlu0 %v393
      %v395 = vpop.xlane.xlu0 %394
      %v396 = vmul.f32 %v395, 0.0078125
      %v397 = vmul.f32 %v392, %v392
      %v398 = vsub.f32 %v396, %v397
      %v399 = vmax.f32 %v398, 0.0
      %v400 = vadd.f32 %v399, 1e-05
      %v401 = vrsqrt.pop %v400
      %v402 = vmul.f32 %v401, %v67
      %v403 = vmul.f32 %v392, %v402
      %v404 = vsub.f32 %v68, %v403
      %406 = vset.pattern.permute.xlu0 0
      %407 = vperm.xlu0 %406, %v402
      %v408 = vpop.permute.xlu0 %407
      %v410 = vmul.f32 %v389, %v408
      %412 = vset.pattern.permute.xlu0 0
      %413 = vperm.xlu0 %412, %v404
      %v414 = vpop.permute.xlu0 %413
      %v416 = vadd.f32 %v410, %v414
      %v417 = vmax.f32 %v416, 0.0
      %418 = vrot.lane.b32.xlu0 %v417, 9
      %v419 = vpop.permute.xlu0 %418
      %v420 = vmul.f32 %v419, %v84
      %421 = vrot.lane.b32.xlu0 %v417, 8
      %v422 = vpop.permute.xlu0 %421
      %v423 = vmul.f32 %v422, %v91
      %424 = vrot.lane.b32.xlu0 %v417, 7
      %v425 = vpop.permute.xlu0 %424
      %v426 = vmul.f32 %v425, %v98
      %427 = vrot.lane.b32.xlu0 %v417, 1
      %v428 = vpop.permute.xlu0 %427
      %v429 = vmul.f32 %v428, %v105
      %430 = vrot.lane.b32.xlu0 %v417, 127
      %v431 = vpop.permute.xlu0 %430
      %v432 = vmul.f32 %v431, %v112
      %433 = vrot.lane.b32.xlu0 %v417, 121
      %v434 = vpop.permute.xlu0 %433
      %v435 = vmul.f32 %v434, %v119
      %436 = vrot.lane.b32.xlu0 %v417, 120
      %v437 = vpop.permute.xlu0 %436
      %v438 = vmul.f32 %v437, %v126
      %439 = vrot.lane.b32.xlu0 %v417, 119
      %v440 = vpop.permute.xlu0 %439
      %v441 = vmul.f32 %v440, %v133
      %443 = vset.pattern.permute.xlu0 0
      %444 = vperm.xlu0 %443, %v69
      %v445 = vpop.permute.xlu0 %444
      %v447 = vmul.f32 %v420, %v445
      %448 = vset.pattern.permute.xlu0 1
      %449 = vperm.xlu0 %448, %v69
      %v450 = vpop.permute.xlu0 %449
      %v452 = vmul.f32 %v423, %v450
      %v453 = vadd.f32 %v447, %v452
      %454 = vset.pattern.permute.xlu0 2
      %455 = vperm.xlu0 %454, %v69
      %v456 = vpop.permute.xlu0 %455
      %v458 = vmul.f32 %v426, %v456
      %v459 = vadd.f32 %v453, %v458
      %460 = vset.pattern.permute.xlu0 3
      %461 = vperm.xlu0 %460, %v69
      %v462 = vpop.permute.xlu0 %461
      %v464 = vmul.f32 %v429, %v462
      %v465 = vadd.f32 %v459, %v464
      %466 = vset.pattern.permute.xlu0 4
      %467 = vperm.xlu0 %466, %v69
      %v468 = vpop.permute.xlu0 %467
      %v470 = vmul.f32 %v417, %v468
      %v471 = vadd.f32 %v465, %v470
      %472 = vset.pattern.permute.xlu0 5
      %473 = vperm.xlu0 %472, %v69
      %v474 = vpop.permute.xlu0 %473
      %v476 = vmul.f32 %v432, %v474
      %v477 = vadd.f32 %v471, %v476
      %478 = vset.pattern.permute.xlu0 6
      %479 = vperm.xlu0 %478, %v69
      %v480 = vpop.permute.xlu0 %479
      %v482 = vmul.f32 %v435, %v480
      %v483 = vadd.f32 %v477, %v482
      %484 = vset.pattern.permute.xlu0 7
      %485 = vperm.xlu0 %484, %v69
      %v486 = vpop.permute.xlu0 %485
      %v488 = vmul.f32 %v438, %v486
      %v489 = vadd.f32 %v483, %v488
      %490 = vset.pattern.permute.xlu0 8
      %491 = vperm.xlu0 %490, %v69
      %v492 = vpop.permute.xlu0 %491
      %v494 = vmul.f32 %v441, %v492
      %v495 = vadd.f32 %v489, %v494
      %497 = vset.pattern.permute.xlu0 0
      %498 = vperm.xlu0 %497, %v70
      %v499 = vpop.permute.xlu0 %498
      %v501 = vadd.f32 %v495, %v499
      %v502 = vadd.f32 %v501, %v220
    $region70: #{aam_forward.1} parent=1 // loop_footer
      %s77 = sadd.s32 1, %s73
    $region71: #{aam_forward.1} parent=1 // loop_footer_branch
      %72 = sbr.rel target = $region67
    $region72: #{aam_forward.1} parent=1 // loop_exit
      _
    %503 = vrot.lane.b32.xlu0 %v78, 9
    %v504 = vpop.permute.xlu0 %503
    %v505 = vlaneseq
    %v506 = vshrl.u32 %v505, 7
    %v507 = vsub.s32 0, %v506
    %v508 = vrot.slane %v57, %v507
    %v509 = vmul.f32 %v504, %v508
    %510 = vrot.lane.b32.xlu0 %v78, 8
    %v511 = vpop.permute.xlu0 %510
    %v512 = vlaneseq
    %v513 = vshrl.u32 %v512, 7
    %v514 = vsub.s32 1, %v513
    %v515 = vrot.slane %v57, %v514
    %v516 = vmul.f32 %v511, %v515
    %517 = vrot.lane.b32.xlu0 %v78, 7
    %v518 = vpop.permute.xlu0 %517
    %v519 = vlaneseq
    %v520 = vshrl.u32 %v519, 7
    %v521 = vsub.s32 2, %v520
    %v522 = vrot.slane %v57, %v521
    %v523 = vmul.f32 %v518, %v522
    %524 = vrot.lane.b32.xlu0 %v78, 1
    %v525 = vpop.permute.xlu0 %524
    %v526 = vlaneseq
    %v527 = vshrl.u32 %v526, 7
    %v528 = vsub.s32 3, %v527
    %v529 = vrot.slane %v57, %v528
    %v530 = vmul.f32 %v525, %v529
    %531 = vrot.lane.b32.xlu0 %v78, 127
    %v532 = vpop.permute.xlu0 %531
    %v533 = vlaneseq
    %v534 = vshrl.u32 %v533, 7
    %v535 = vsub.s32 5, %v534
    %v536 = vrot.slane %v57, %v535
    %v537 = vmul.f32 %v532, %v536
    %538 = vrot.lane.b32.xlu0 %v78, 121
    %v539 = vpop.permute.xlu0 %538
    %v540 = vlaneseq
    %v541 = vshrl.u32 %v540, 7
    %v542 = vsub.s32 6, %v541
    %v543 = vrot.slane %v57, %v542
    %v544 = vmul.f32 %v539, %v543
    %545 = vrot.lane.b32.xlu0 %v78, 120
    %v546 = vpop.permute.xlu0 %545
    %v547 = vlaneseq
    %v548 = vshrl.u32 %v547, 7
    %v549 = vsub.s32 7, %v548
    %v550 = vrot.slane %v57, %v549
    %v551 = vmul.f32 %v546, %v550
    %552 = vrot.lane.b32.xlu0 %v78, 119
    %v553 = vpop.permute.xlu0 %552
    %v554 = vlaneseq
    %v555 = vshrl.u32 %v554, 7
    %v556 = vsub.s32 0, %v555
    %v557 = vrot.slane %v58, %v556
    %v558 = vmul.f32 %v553, %v557
    %v559 = vpack.c.bf16 %v516, %v509
    %v560 = vpack.c.bf16 %v530, %v523
    %v561 = vpack.c.bf16 %v537, %v78
    %v562 = vpack.c.bf16 %v551, %v544
    %v563 = vpack.c.bf16 %v558, %v558
    %565 = vset.pattern.permute.xlu0 0
    %566 = vperm.xlu0 %565, %v60
    %v567 = vpop.permute.xlu0 %566
    %vm569 = vcmask 588800
    %v571 = vsel %vm569, %v59, 0
    %vm573 = vcmask 1043456
    %v575 = vsel %vm573, %v563, 0
    %577 = vmatprep.subr.bf16.mxu0 0
    %578 = vmatpush1.bf16.msra.mxu0 %v559
    %579 = vmatprep.subr.bf16.mxu0 0
    %580 = vmatpush1.bf16.msra.mxu0 %v560
    %581 = vmatprep.subr.bf16.mxu0 0
    %582 = vmatpush1.bf16.msra.mxu0 %v561
    %583 = vmatprep.subr.bf16.mxu0 0
    %584 = vmatpush1.bf16.msra.mxu0 %v562
    %585 = vmatprep.subr.bf16.mxu0 0
    %586 = vmatpush1.bf16.msra.mxu0 %v575
    %587 = vmatprep.subr.bf16.mxu0 0
    %588 = vmatpush1.bf16.msra.mxu0 0
    %589 = vmatprep.subr.bf16.mxu0 0
    %590 = vmatpush1.bf16.msra.mxu0 0
    %591 = vmatprep.subr.bf16.mxu0 0
    %592 = vmatpush1.bf16.msra.mxu0 0
    %593 = vmatprep.subr.bf16.mxu0 0
    %594 = vmatpush1.bf16.msra.mxu0 0
    %595 = vmatprep.subr.bf16.mxu0 0
    %596 = vmatpush1.bf16.msra.mxu0 0
    %597 = vmatprep.subr.bf16.mxu0 0
    %598 = vmatpush1.bf16.msra.mxu0 0
    %599 = vmatprep.subr.bf16.mxu0 0
    %600 = vmatpush1.bf16.msra.mxu0 0
    %601 = vmatprep.subr.bf16.mxu0 0
    %602 = vmatpush1.bf16.msra.mxu0 0
    %603 = vmatprep.subr.bf16.mxu0 0
    %604 = vmatpush1.bf16.msra.mxu0 0
    %605 = vmatprep.subr.bf16.mxu0 0
    %606 = vmatpush1.bf16.msra.mxu0 0
    %607 = vmatprep.subr.bf16.mxu0 0
    %608 = vmatpush1.bf16.msra.mxu0 0
    %609 = vmatprep.mubr.bf16.mxu0 0
    %610 = vmatmul.mubr.bf16.gmra.mrb[0].mxu0 %v571
    %v611 = vpop.f32.mrb[0].mxu0
    %v612 = vadd.f32 %v567, %v611
    %v613 = vpop.f32.mrb[0].mxu0
    %v614 = vpop.f32.mrb[0].mxu0
    %v615 = vpop.f32.mrb[0].mxu0
    %616 = vdwg.mxu0
    %617 = vadd.xlane.f32.xlu0 %v612
    %v618 = vpop.xlane.xlu0 %617
    %v619 = vmul.f32 %v618, 0.0078125
    %v620 = vmul.f32 %v612, %v612
    %621 = vadd.xlane.f32.xlu0 %v620
    %v622 = vpop.xlane.xlu0 %621
    %v623 = vmul.f32 %v622, 0.0078125
    %v624 = vmul.f32 %v619, %v619
    %v625 = vsub.f32 %v623, %v624
    %v626 = vmax.f32 %v625, 0.0
    %v627 = vadd.f32 %v626, 1e-05
    %v628 = vrsqrt.pop %v627
    %v629 = vmul.f32 %v628, %v61
    %v630 = vmul.f32 %v619, %v629
    %v631 = vsub.f32 %v62, %v630
    %633 = vset.pattern.permute.xlu0 0
    %634 = vperm.xlu0 %633, %v629
    %v635 = vpop.permute.xlu0 %634
    %v637 = vmul.f32 %v612, %v635
    %639 = vset.pattern.permute.xlu0 0
    %640 = vperm.xlu0 %639, %v631
    %v641 = vpop.permute.xlu0 %640
    %v643 = vadd.f32 %v637, %v641
    %v644 = vmax.f32 %v643, 0.0
    %645 = vst [vmem:[%s17] sm:$0xff] %v644
    %v646 = vld [vmem:[%s15] sm:$0x1]
    %v647 = vpack.c.bf16 %v644, %v644
    %v648 = vld [vmem:[%s14] sm:$0xf]
    %v649 = vld [vmem:[%s14 + $0x4] sm:$0xf]
    %v650 = vld [vmem:[%s14 + $0x8] sm:$0xf]
    %v651 = vld [vmem:[%s14 + $0xc] sm:$0xf]
    %v652 = vld [vmem:[%s14 + $0x10] sm:$0xf]
    %v653 = vld [vmem:[%s14 + $0x14] sm:$0xf]
    %v654 = vld [vmem:[%s14 + $0x18] sm:$0xf]
    %v655 = vld [vmem:[%s14 + $0x1c] sm:$0xf]
    %v664 = vunpack.c.l.b16 %v648
    %v665 = vunpack.c.l.b16 %v649
    %v666 = vunpack.c.l.b16 %v650
    %v667 = vunpack.c.l.b16 %v651
    %v668 = vunpack.c.l.b16 %v652
    %v669 = vunpack.c.l.b16 %v653
    %v670 = vunpack.c.l.b16 %v654
    %v671 = vunpack.c.l.b16 %v655
    %v672 = vpack.c.b16 %v665, %v664
    %v673 = vpack.c.b16 %v667, %v666
    %v674 = vpack.c.b16 %v669, %v668
    %v675 = vpack.c.b16 %v671, %v670
    %vm680 = vcmask 523264
    %v682 = vsel %vm680, %v647, 0
    %684 = vmatprep.subr.bf16.mxu0 0
    %685 = vmatpush1.bf16.msra.mxu0 %v672
    %686 = vmatprep.subr.bf16.mxu0 0
    %687 = vmatpush1.bf16.msra.mxu0 %v673
    %688 = vmatprep.subr.bf16.mxu0 0
    %689 = vmatpush1.bf16.msra.mxu0 %v674
    %690 = vmatprep.subr.bf16.mxu0 0
    %691 = vmatpush1.bf16.msra.mxu0 %v675
    %692 = vmatprep.subr.bf16.mxu0 0
    %693 = vmatpush1.bf16.msra.mxu0 0
    %694 = vmatprep.subr.bf16.mxu0 0
    %695 = vmatpush1.bf16.msra.mxu0 0
    %696 = vmatprep.subr.bf16.mxu0 0
    %697 = vmatpush1.bf16.msra.mxu0 0
    %698 = vmatprep.subr.bf16.mxu0 0
    %699 = vmatpush1.bf16.msra.mxu0 0
    %700 = vmatprep.subr.bf16.mxu0 0
    %701 = vmatpush1.bf16.msra.mxu0 0
    %702 = vmatprep.subr.bf16.mxu0 0
    %703 = vmatpush1.bf16.msra.mxu0 0
    %704 = vmatprep.subr.bf16.mxu0 0
    %705 = vmatpush1.bf16.msra.mxu0 0
    %706 = vmatprep.subr.bf16.mxu0 0
    %707 = vmatpush1.bf16.msra.mxu0 0
    %708 = vmatprep.subr.bf16.mxu0 0
    %709 = vmatpush1.bf16.msra.mxu0 0
    %710 = vmatprep.subr.bf16.mxu0 0
    %711 = vmatpush1.bf16.msra.mxu0 0
    %712 = vmatprep.subr.bf16.mxu0 0
    %713 = vmatpush1.bf16.msra.mxu0 0
    %714 = vmatprep.subr.bf16.mxu0 0
    %715 = vmatpush1.bf16.msra.mxu0 0
    %716 = vmatprep.mubr.bf16.mxu0 0
    %717 = vmatmul.mubr.bf16.gmra.mrb[0].mxu0 %v682
    %v718 = vpop.f32.mrb[0].mxu0
    %v719 = vadd.f32 0.0, %v718
    %v720 = vpop.f32.mrb[0].mxu0
    %v721 = vpop.f32.mrb[0].mxu0
    %v722 = vpop.f32.mrb[0].mxu0
    %723 = vdwg.mxu0
    %v724 = vadd.f32 %v646, %v719
    %v725 = vld [vmem:[%s14 + $0x20] sm:$0xf]
    %v726 = vld [vmem:[%s14 + $0x24] sm:$0xf]
    %v727 = vld [vmem:[%s14 + $0x28] sm:$0xf]
    %v728 = vld [vmem:[%s14 + $0x2c] sm:$0xf]
    %v729 = vld [vmem:[%s14 + $0x30] sm:$0xf]
    %v730 = vld [vmem:[%s14 + $0x34] sm:$0xf]
    %v731 = vld [vmem:[%s14 + $0x38] sm:$0xf]
    %v732 = vld [vmem:[%s14 + $0x3c] sm:$0xf]
    %v733 = vshrl.u32 %v647, 16
    %v743 = vunpack.c.l.b16 %v725
    %v744 = vunpack.c.l.b16 %v726
    %v745 = vunpack.c.l.b16 %v727
    %v746 = vunpack.c.l.b16 %v728
    %v747 = vunpack.c.l.b16 %v729
    %v748 = vunpack.c.l.b16 %v730
    %v749 = vunpack.c.l.b16 %v731
    %v750 = vunpack.c.l.b16 %v732
    %v751 = vpack.c.b16 %v744, %v743
    %v752 = vpack.c.b16 %v746, %v745
    %v753 = vpack.c.b16 %v748, %v747
    %v754 = vpack.c.b16 %v750, %v749
    %v760 = vsel %vm680, %v733, 0
    %762 = vmatprep.subr.bf16.mxu0 0
    %763 = vmatpush1.bf16.msra.mxu0 %v751
    %764 = vmatprep.subr.bf16.mxu0 0
    %765 = vmatpush1.bf16.msra.mxu0 %v752
    %766 = vmatprep.subr.bf16.mxu0 0
    %767 = vmatpush1.bf16.msra.mxu0 %v753
    %768 = vmatprep.subr.bf16.mxu0 0
    %769 = vmatpush1.bf16.msra.mxu0 %v754
    %770 = vmatprep.subr.bf16.mxu0 0
    %771 = vmatpush1.bf16.msra.mxu0 0
    %772 = vmatprep.subr.bf16.mxu0 0
    %773 = vmatpush1.bf16.msra.mxu0 0
    %774 = vmatprep.subr.bf16.mxu0 0
    %775 = vmatpush1.bf16.msra.mxu0 0
    %776 = vmatprep.subr.bf16.mxu0 0
    %777 = vmatpush1.bf16.msra.mxu0 0
    %778 = vmatprep.subr.bf16.mxu0 0
    %779 = vmatpush1.bf16.msra.mxu0 0
    %780 = vmatprep.subr.bf16.mxu0 0
    %781 = vmatpush1.bf16.msra.mxu0 0
    %782 = vmatprep.subr.bf16.mxu0 0
    %783 = vmatpush1.bf16.msra.mxu0 0
    %784 = vmatprep.subr.bf16.mxu0 0
    %785 = vmatpush1.bf16.msra.mxu0 0
    %786 = vmatprep.subr.bf16.mxu0 0
    %787 = vmatpush1.bf16.msra.mxu0 0
    %788 = vmatprep.subr.bf16.mxu0 0
    %789 = vmatpush1.bf16.msra.mxu0 0
    %790 = vmatprep.subr.bf16.mxu0 0
    %791 = vmatpush1.bf16.msra.mxu0 0
    %792 = vmatprep.subr.bf16.mxu0 0
    %793 = vmatpush1.bf16.msra.mxu0 0
    %794 = vmatprep.mubr.bf16.mxu0 0
    %795 = vmatmul.mubr.bf16.gmra.mrb[0].mxu0 %v760
    %v796 = vpop.f32.mrb[0].mxu0
    %v797 = vadd.f32 0.0, %v796
    %v798 = vpop.f32.mrb[0].mxu0
    %v799 = vpop.f32.mrb[0].mxu0
    %v800 = vpop.f32.mrb[0].mxu0
    %801 = vdwg.mxu0
    %v802 = vadd.f32 %v724, %v797
    %v803 = vld [vmem:[%s14 + $0x40] sm:$0xf]
    %v804 = vld [vmem:[%s14 + $0x44] sm:$0xf]
    %v805 = vld [vmem:[%s14 + $0x48] sm:$0xf]
    %v806 = vld [vmem:[%s14 + $0x4c] sm:$0xf]
    %v807 = vld [vmem:[%s14 + $0x50] sm:$0xf]
    %v808 = vld [vmem:[%s14 + $0x54] sm:$0xf]
    %v809 = vld [vmem:[%s14 + $0x58] sm:$0xf]
    %v810 = vld [vmem:[%s14 + $0x5c] sm:$0xf]
    %v812 = vrot.slane %v647, 1
    %v821 = vunpack.c.l.b16 %v803
    %v822 = vunpack.c.l.b16 %v804
    %v823 = vunpack.c.l.b16 %v805
    %v824 = vunpack.c.l.b16 %v806
    %v825 = vunpack.c.l.b16 %v807
    %v826 = vunpack.c.l.b16 %v808
    %v827 = vunpack.c.l.b16 %v809
    %v828 = vunpack.c.l.b16 %v810
    %v829 = vpack.c.b16 %v822, %v821
    %v830 = vpack.c.b16 %v824, %v823
    %v831 = vpack.c.b16 %v826, %v825
    %v832 = vpack.c.b16 %v828, %v827
    %v838 = vsel %vm680, %v812, 0
    %840 = vmatprep.subr.bf16.mxu0 0
    %841 = vmatpush1.bf16.msra.mxu0 %v829
    %842 = vmatprep.subr.bf16.mxu0 0
    %843 = vmatpush1.bf16.msra.mxu0 %v830
    %844 = vmatprep.subr.bf16.mxu0 0
    %845 = vmatpush1.bf16.msra.mxu0 %v831
    %846 = vmatprep.subr.bf16.mxu0 0
    %847 = vmatpush1.bf16.msra.mxu0 %v832
    %848 = vmatprep.subr.bf16.mxu0 0
    %849 = vmatpush1.bf16.msra.mxu0 0
    %850 = vmatprep.subr.bf16.mxu0 0
    %851 = vmatpush1.bf16.msra.mxu0 0
    %852 = vmatprep.subr.bf16.mxu0 0
    %853 = vmatpush1.bf16.msra.mxu0 0
    %854 = vmatprep.subr.bf16.mxu0 0
    %855 = vmatpush1.bf16.msra.mxu0 0
    %856 = vmatprep.subr.bf16.mxu0 0
    %857 = vmatpush1.bf16.msra.mxu0 0
    %858 = vmatprep.subr.bf16.mxu0 0
    %859 = vmatpush1.bf16.msra.mxu0 0
    %860 = vmatprep.subr.bf16.mxu0 0
    %861 = vmatpush1.bf16.msra.mxu0 0
    %862 = vmatprep.subr.bf16.mxu0 0
    %863 = vmatpush1.bf16.msra.mxu0 0
    %864 = vmatprep.subr.bf16.mxu0 0
    %865 = vmatpush1.bf16.msra.mxu0 0
    %866 = vmatprep.subr.bf16.mxu0 0
    %867 = vmatpush1.bf16.msra.mxu0 0
    %868 = vmatprep.subr.bf16.mxu0 0
    %869 = vmatpush1.bf16.msra.mxu0 0
    %870 = vmatprep.subr.bf16.mxu0 0
    %871 = vmatpush1.bf16.msra.mxu0 0
    %872 = vmatprep.mubr.bf16.mxu0 0
    %873 = vmatmul.mubr.bf16.gmra.mrb[0].mxu0 %v838
    %v874 = vpop.f32.mrb[0].mxu0
    %v875 = vadd.f32 0.0, %v874
    %v876 = vpop.f32.mrb[0].mxu0
    %v877 = vpop.f32.mrb[0].mxu0
    %v878 = vpop.f32.mrb[0].mxu0
    %879 = vdwg.mxu0
    %v880 = vadd.f32 %v802, %v875
    %v881 = vld [vmem:[%s14 + $0x60] sm:$0xf]
    %v882 = vld [vmem:[%s14 + $0x64] sm:$0xf]
    %v883 = vld [vmem:[%s14 + $0x68] sm:$0xf]
    %v884 = vld [vmem:[%s14 + $0x6c] sm:$0xf]
    %v885 = vld [vmem:[%s14 + $0x70] sm:$0xf]
    %v886 = vld [vmem:[%s14 + $0x74] sm:$0xf]
    %v887 = vld [vmem:[%s14 + $0x78] sm:$0xf]
    %v888 = vld [vmem:[%s14 + $0x7c] sm:$0xf]
    %v889 = vrot.slane %v733, 1
    %v898 = vunpack.c.l.b16 %v881
    %v899 = vunpack.c.l.b16 %v882
    %v900 = vunpack.c.l.b16 %v883
    %v901 = vunpack.c.l.b16 %v884
    %v902 = vunpack.c.l.b16 %v885
    %v903 = vunpack.c.l.b16 %v886
    %v904 = vunpack.c.l.b16 %v887
    %v905 = vunpack.c.l.b16 %v888
    %v906 = vpack.c.b16 %v899, %v898
    %v907 = vpack.c.b16 %v901, %v900
    %v908 = vpack.c.b16 %v903, %v902
    %v909 = vpack.c.b16 %v905, %v904
    %v915 = vsel %vm680, %v889, 0
    %917 = vmatprep.subr.bf16.mxu0 0
    %918 = vmatpush1.bf16.msra.mxu0 %v906
    %919 = vmatprep.subr.bf16.mxu0 0
    %920 = vmatpush1.bf16.msra.mxu0 %v907
    %921 = vmatprep.subr.bf16.mxu0 0
    %922 = vmatpush1.bf16.msra.mxu0 %v908
    %923 = vmatprep.subr.bf16.mxu0 0
    %924 = vmatpush1.bf16.msra.mxu0 %v909
    %925 = vmatprep.subr.bf16.mxu0 0
    %926 = vmatpush1.bf16.msra.mxu0 0
    %927 = vmatprep.subr.bf16.mxu0 0
    %928 = vmatpush1.bf16.msra.mxu0 0
    %929 = vmatprep.subr.bf16.mxu0 0
    %930 = vmatpush1.bf16.msra.mxu0 0
    %931 = vmatprep.subr.bf16.mxu0 0
    %932 = vmatpush1.bf16.msra.mxu0 0
    %933 = vmatprep.subr.bf16.mxu0 0
    %934 = vmatpush1.bf16.msra.mxu0 0
    %935 = vmatprep.subr.bf16.mxu0 0
    %936 = vmatpush1.bf16.msra.mxu0 0
    %937 = vmatprep.subr.bf16.mxu0 0
    %938 = vmatpush1.bf16.msra.mxu0 0
    %939 = vmatprep.subr.bf16.mxu0 0
    %940 = vmatpush1.bf16.msra.mxu0 0
    %941 = vmatprep.subr.bf16.mxu0 0
    %942 = vmatpush1.bf16.msra.mxu0 0
    %943 = vmatprep.subr.bf16.mxu0 0
    %944 = vmatpush1.bf16.msra.mxu0 0
    %945 = vmatprep.subr.bf16.mxu0 0
    %946 = vmatpush1.bf16.msra.mxu0 0
    %947 = vmatprep.subr.bf16.mxu0 0
    %948 = vmatpush1.bf16.msra.mxu0 0
    %949 = vmatprep.mubr.bf16.mxu0 0
    %950 = vmatmul.mubr.bf16.gmra.mrb[0].mxu0 %v915
    %v951 = vpop.f32.mrb[0].mxu0
    %v952 = vadd.f32 0.0, %v951
    %v953 = vpop.f32.mrb[0].mxu0
    %v954 = vpop.f32.mrb[0].mxu0
    %v955 = vpop.f32.mrb[0].mxu0
    %956 = vdwg.mxu0
    %v957 = vadd.f32 %v880, %v952
    %v958 = vld [vmem:[%s14 + $0x80] sm:$0xf]
    %v959 = vld [vmem:[%s14 + $0x84] sm:$0xf]
    %v960 = vld [vmem:[%s14 + $0x88] sm:$0xf]
    %v961 = vld [vmem:[%s14 + $0x8c] sm:$0xf]
    %v962 = vld [vmem:[%s14 + $0x90] sm:$0xf]
    %v963 = vld [vmem:[%s14 + $0x94] sm:$0xf]
    %v964 = vld [vmem:[%s14 + $0x98] sm:$0xf]
    %v965 = vld [vmem:[%s14 + $0x9c] sm:$0xf]
    %v966 = vrot.slane %v647, 2
    %v975 = vunpack.c.l.b16 %v958
    %v976 = vunpack.c.l.b16 %v959
    %v977 = vunpack.c.l.b16 %v960
    %v978 = vunpack.c.l.b16 %v961
    %v979 = vunpack.c.l.b16 %v962
    %v980 = vunpack.c.l.b16 %v963
    %v981 = vunpack.c.l.b16 %v964
    %v982 = vunpack.c.l.b16 %v965
    %v983 = vpack.c.b16 %v976, %v975
    %v984 = vpack.c.b16 %v978, %v977
    %v985 = vpack.c.b16 %v980, %v979
    %v986 = vpack.c.b16 %v982, %v981
    %v992 = vsel %vm680, %v966, 0
    %994 = vmatprep.subr.bf16.mxu0 0
    %995 = vmatpush1.bf16.msra.mxu0 %v983
    %996 = vmatprep.subr.bf16.mxu0 0
    %997 = vmatpush1.bf16.msra.mxu0 %v984
    %998 = vmatprep.subr.bf16.mxu0 0
    %999 = vmatpush1.bf16.msra.mxu0 %v985
    %1000 = vmatprep.subr.bf16.mxu0 0
    %1001 = vmatpush1.bf16.msra.mxu0 %v986
    %1002 = vmatprep.subr.bf16.mxu0 0
    %1003 = vmatpush1.bf16.msra.mxu0 0
    %1004 = vmatprep.subr.bf16.mxu0 0
    %1005 = vmatpush1.bf16.msra.mxu0 0
    %1006 = vmatprep.subr.bf16.mxu0 0
    %1007 = vmatpush1.bf16.msra.mxu0 0
    %1008 = vmatprep.subr.bf16.mxu0 0
    %1009 = vmatpush1.bf16.msra.mxu0 0
    %1010 = vmatprep.subr.bf16.mxu0 0
    %1011 = vmatpush1.bf16.msra.mxu0 0
    %1012 = vmatprep.subr.bf16.mxu0 0
    %1013 = vmatpush1.bf16.msra.mxu0 0
    %1014 = vmatprep.subr.bf16.mxu0 0
    %1015 = vmatpush1.bf16.msra.mxu0 0
    %1016 = vmatprep.subr.bf16.mxu0 0
    %1017 = vmatpush1.bf16.msra.mxu0 0
    %1018 = vmatprep.subr.bf16.mxu0 0
    %1019 = vmatpush1.bf16.msra.mxu0 0
    %1020 = vmatprep.subr.bf16.mxu0 0
    %1021 = vmatpush1.bf16.msra.mxu0 0
    %1022 = vmatprep.subr.bf16.mxu0 0
    %1023 = vmatpush1.bf16.msra.mxu0 0
    %1024 = vmatprep.subr.bf16.mxu0 0
    %1025 = vmatpush1.bf16.msra.mxu0 0
    %1026 = vmatprep.mubr.bf16.mxu0 0
    %1027 = vmatmul.mubr.bf16.gmra.mrb[0].mxu0 %v992
    %v1028 = vpop.f32.mrb[0].mxu0
    %v1029 = vadd.f32 0.0, %v1028
    %v1030 = vpop.f32.mrb[0].mxu0
    %v1031 = vpop.f32.mrb[0].mxu0
    %v1032 = vpop.f32.mrb[0].mxu0
    %1033 = vdwg.mxu0
    %v1034 = vadd.f32 %v957, %v1029
    %v1035 = vld [vmem:[%s14 + $0xa0] sm:$0xf]
    %v1036 = vld [vmem:[%s14 + $0xa4] sm:$0xf]
    %v1037 = vld [vmem:[%s14 + $0xa8] sm:$0xf]
    %v1038 = vld [vmem:[%s14 + $0xac] sm:$0xf]
    %v1039 = vld [vmem:[%s14 + $0xb0] sm:$0xf]
    %v1040 = vld [vmem:[%s14 + $0xb4] sm:$0xf]
    %v1041 = vld [vmem:[%s14 + $0xb8] sm:$0xf]
    %v1042 = vld [vmem:[%s14 + $0xbc] sm:$0xf]
    %v1043 = vrot.slane %v733, 2
    %v1052 = vunpack.c.l.b16 %v1035
    %v1053 = vunpack.c.l.b16 %v1036
    %v1054 = vunpack.c.l.b16 %v1037
    %v1055 = vunpack.c.l.b16 %v1038
    %v1056 = vunpack.c.l.b16 %v1039
    %v1057 = vunpack.c.l.b16 %v1040
    %v1058 = vunpack.c.l.b16 %v1041
    %v1059 = vunpack.c.l.b16 %v1042
    %v1060 = vpack.c.b16 %v1053, %v1052
    %v1061 = vpack.c.b16 %v1055, %v1054
    %v1062 = vpack.c.b16 %v1057, %v1056
    %v1063 = vpack.c.b16 %v1059, %v1058
    %v1069 = vsel %vm680, %v1043, 0
    %1071 = vmatprep.subr.bf16.mxu0 0
    %1072 = vmatpush1.bf16.msra.mxu0 %v1060
    %1073 = vmatprep.subr.bf16.mxu0 0
    %1074 = vmatpush1.bf16.msra.mxu0 %v1061
    %1075 = vmatprep.subr.bf16.mxu0 0
    %1076 = vmatpush1.bf16.msra.mxu0 %v1062
    %1077 = vmatprep.subr.bf16.mxu0 0
    %1078 = vmatpush1.bf16.msra.mxu0 %v1063
    %1079 = vmatprep.subr.bf16.mxu0 0
    %1080 = vmatpush1.bf16.msra.mxu0 0
    %1081 = vmatprep.subr.bf16.mxu0 0
    %1082 = vmatpush1.bf16.msra.mxu0 0
    %1083 = vmatprep.subr.bf16.mxu0 0
    %1084 = vmatpush1.bf16.msra.mxu0 0
    %1085 = vmatprep.subr.bf16.mxu0 0
    %1086 = vmatpush1.bf16.msra.mxu0 0
    %1087 = vmatprep.subr.bf16.mxu0 0
    %1088 = vmatpush1.bf16.msra.mxu0 0
    %1089 = vmatprep.subr.bf16.mxu0 0
    %1090 = vmatpush1.bf16.msra.mxu0 0
    %1091 = vmatprep.subr.bf16.mxu0 0
    %1092 = vmatpush1.bf16.msra.mxu0 0
    %1093 = vmatprep.subr.bf16.mxu0 0
    %1094 = vmatpush1.bf16.msra.mxu0 0
    %1095 = vmatprep.subr.bf16.mxu0 0
    %1096 = vmatpush1.bf16.msra.mxu0 0
    %1097 = vmatprep.subr.bf16.mxu0 0
    %1098 = vmatpush1.bf16.msra.mxu0 0
    %1099 = vmatprep.subr.bf16.mxu0 0
    %1100 = vmatpush1.bf16.msra.mxu0 0
    %1101 = vmatprep.subr.bf16.mxu0 0
    %1102 = vmatpush1.bf16.msra.mxu0 0
    %1103 = vmatprep.mubr.bf16.mxu0 0
    %1104 = vmatmul.mubr.bf16.gmra.mrb[0].mxu0 %v1069
    %v1105 = vpop.f32.mrb[0].mxu0
    %v1106 = vadd.f32 0.0, %v1105
    %v1107 = vpop.f32.mrb[0].mxu0
    %v1108 = vpop.f32.mrb[0].mxu0
    %v1109 = vpop.f32.mrb[0].mxu0
    %1110 = vdwg.mxu0
    %v1111 = vadd.f32 %v1034, %v1106
    %v1112 = vld [vmem:[%s14 + $0xc0] sm:$0xf]
    %v1113 = vld [vmem:[%s14 + $0xc4] sm:$0xf]
    %v1114 = vld [vmem:[%s14 + $0xc8] sm:$0xf]
    %v1115 = vld [vmem:[%s14 + $0xcc] sm:$0xf]
    %v1116 = vld [vmem:[%s14 + $0xd0] sm:$0xf]
    %v1117 = vld [vmem:[%s14 + $0xd4] sm:$0xf]
    %v1118 = vld [vmem:[%s14 + $0xd8] sm:$0xf]
    %v1119 = vld [vmem:[%s14 + $0xdc] sm:$0xf]
    %v1120 = vrot.slane %v647, 3
    %v1129 = vunpack.c.l.b16 %v1112
    %v1130 = vunpack.c.l.b16 %v1113
    %v1131 = vunpack.c.l.b16 %v1114
    %v1132 = vunpack.c.l.b16 %v1115
    %v1133 = vunpack.c.l.b16 %v1116
    %v1134 = vunpack.c.l.b16 %v1117
    %v1135 = vunpack.c.l.b16 %v1118
    %v1136 = vunpack.c.l.b16 %v1119
    %v1137 = vpack.c.b16 %v1130, %v1129
    %v1138 = vpack.c.b16 %v1132, %v1131
    %v1139 = vpack.c.b16 %v1134, %v1133
    %v1140 = vpack.c.b16 %v1136, %v1135
    %v1146 = vsel %vm680, %v1120, 0
    %1148 = vmatprep.subr.bf16.mxu0 0
    %1149 = vmatpush1.bf16.msra.mxu0 %v1137
    %1150 = vmatprep.subr.bf16.mxu0 0
    %1151 = vmatpush1.bf16.msra.mxu0 %v1138
    %1152 = vmatprep.subr.bf16.mxu0 0
    %1153 = vmatpush1.bf16.msra.mxu0 %v1139
    %1154 = vmatprep.subr.bf16.mxu0 0
    %1155 = vmatpush1.bf16.msra.mxu0 %v1140
    %1156 = vmatprep.subr.bf16.mxu0 0
    %1157 = vmatpush1.bf16.msra.mxu0 0
    %1158 = vmatprep.subr.bf16.mxu0 0
    %1159 = vmatpush1.bf16.msra.mxu0 0
    %1160 = vmatprep.subr.bf16.mxu0 0
    %1161 = vmatpush1.bf16.msra.mxu0 0
    %1162 = vmatprep.subr.bf16.mxu0 0
    %1163 = vmatpush1.bf16.msra.mxu0 0
    %1164 = vmatprep.subr.bf16.mxu0 0
    %1165 = vmatpush1.bf16.msra.mxu0 0
    %1166 = vmatprep.subr.bf16.mxu0 0
    %1167 = vmatpush1.bf16.msra.mxu0 0
    %1168 = vmatprep.subr.bf16.mxu0 0
    %1169 = vmatpush1.bf16.msra.mxu0 0
    %1170 = vmatprep.subr.bf16.mxu0 0
    %1171 = vmatpush1.bf16.msra.mxu0 0
    %1172 = vmatprep.subr.bf16.mxu0 0
    %1173 = vmatpush1.bf16.msra.mxu0 0
    %1174 = vmatprep.subr.bf16.mxu0 0
    %1175 = vmatpush1.bf16.msra.mxu0 0
    %1176 = vmatprep.subr.bf16.mxu0 0
    %1177 = vmatpush1.bf16.msra.mxu0 0
    %1178 = vmatprep.subr.bf16.mxu0 0
    %1179 = vmatpush1.bf16.msra.mxu0 0
    %1180 = vmatprep.mubr.bf16.mxu0 0
    %1181 = vmatmul.mubr.bf16.gmra.mrb[0].mxu0 %v1146
    %v1182 = vpop.f32.mrb[0].mxu0
    %v1183 = vadd.f32 0.0, %v1182
    %v1184 = vpop.f32.mrb[0].mxu0
    %v1185 = vpop.f32.mrb[0].mxu0
    %v1186 = vpop.f32.mrb[0].mxu0
    %1187 = vdwg.mxu0
    %v1188 = vadd.f32 %v1111, %v1183
    %v1189 = vld [vmem:[%s14 + $0xe0] sm:$0xf]
    %v1190 = vld [vmem:[%s14 + $0xe4] sm:$0xf]
    %v1191 = vld [vmem:[%s14 + $0xe8] sm:$0xf]
    %v1192 = vld [vmem:[%s14 + $0xec] sm:$0xf]
    %v1193 = vld [vmem:[%s14 + $0xf0] sm:$0xf]
    %v1194 = vld [vmem:[%s14 + $0xf4] sm:$0xf]
    %v1195 = vld [vmem:[%s14 + $0xf8] sm:$0xf]
    %v1196 = vld [vmem:[%s14 + $0xfc] sm:$0xf]
    %v1197 = vrot.slane %v733, 3
    %v1206 = vunpack.c.l.b16 %v1189
    %v1207 = vunpack.c.l.b16 %v1190
    %v1208 = vunpack.c.l.b16 %v1191
    %v1209 = vunpack.c.l.b16 %v1192
    %v1210 = vunpack.c.l.b16 %v1193
    %v1211 = vunpack.c.l.b16 %v1194
    %v1212 = vunpack.c.l.b16 %v1195
    %v1213 = vunpack.c.l.b16 %v1196
    %v1214 = vpack.c.b16 %v1207, %v1206
    %v1215 = vpack.c.b16 %v1209, %v1208
    %v1216 = vpack.c.b16 %v1211, %v1210
    %v1217 = vpack.c.b16 %v1213, %v1212
    %v1223 = vsel %vm680, %v1197, 0
    %1225 = vmatprep.subr.bf16.mxu0 0
    %1226 = vmatpush1.bf16.msra.mxu0 %v1214
    %1227 = vmatprep.subr.bf16.mxu0 0
    %1228 = vmatpush1.bf16.msra.mxu0 %v1215
    %1229 = vmatprep.subr.bf16.mxu0 0
    %1230 = vmatpush1.bf16.msra.mxu0 %v1216
    %1231 = vmatprep.subr.bf16.mxu0 0
    %1232 = vmatpush1.bf16.msra.mxu0 %v1217
    %1233 = vmatprep.subr.bf16.mxu0 0
    %1234 = vmatpush1.bf16.msra.mxu0 0
    %1235 = vmatprep.subr.bf16.mxu0 0
    %1236 = vmatpush1.bf16.msra.mxu0 0
    %1237 = vmatprep.subr.bf16.mxu0 0
    %1238 = vmatpush1.bf16.msra.mxu0 0
    %1239 = vmatprep.subr.bf16.mxu0 0
    %1240 = vmatpush1.bf16.msra.mxu0 0
    %1241 = vmatprep.subr.bf16.mxu0 0
    %1242 = vmatpush1.bf16.msra.mxu0 0
    %1243 = vmatprep.subr.bf16.mxu0 0
    %1244 = vmatpush1.bf16.msra.mxu0 0
    %1245 = vmatprep.subr.bf16.mxu0 0
    %1246 = vmatpush1.bf16.msra.mxu0 0
    %1247 = vmatprep.subr.bf16.mxu0 0
    %1248 = vmatpush1.bf16.msra.mxu0 0
    %1249 = vmatprep.subr.bf16.mxu0 0
    %1250 = vmatpush1.bf16.msra.mxu0 0
    %1251 = vmatprep.subr.bf16.mxu0 0
    %1252 = vmatpush1.bf16.msra.mxu0 0
    %1253 = vmatprep.subr.bf16.mxu0 0
    %1254 = vmatpush1.bf16.msra.mxu0 0
    %1255 = vmatprep.subr.bf16.mxu0 0
    %1256 = vmatpush1.bf16.msra.mxu0 0
    %1257 = vmatprep.mubr.bf16.mxu0 0
    %1258 = vmatmul.mubr.bf16.gmra.mrb[0].mxu0 %v1223
    %v1259 = vpop.f32.mrb[0].mxu0
    %v1260 = vadd.f32 0.0, %v1259
    %v1261 = vpop.f32.mrb[0].mxu0
    %v1262 = vpop.f32.mrb[0].mxu0
    %v1263 = vpop.f32.mrb[0].mxu0
    %1264 = vdwg.mxu0
    %v1265 = vadd.f32 %v1188, %v1260
    %1266 = vst [vmem:[#allocation2] sm:$0x1] %v1265
    %v1267 = vld [vmem:[%s14] sm:$0xf]
    %v1268 = vld [vmem:[%s14 + $0x4] sm:$0xf]
    %v1269 = vld [vmem:[%s14 + $0x8] sm:$0xf]
    %v1270 = vld [vmem:[%s14 + $0xc] sm:$0xf]
    %v1271 = vld [vmem:[%s14 + $0x10] sm:$0xf]
    %v1272 = vld [vmem:[%s14 + $0x14] sm:$0xf]
    %v1273 = vld [vmem:[%s14 + $0x18] sm:$0xf]
    %v1274 = vld [vmem:[%s14 + $0x1c] sm:$0xf]
    %1275 = vrot.lane.b32.xlu0 %v647, 64
    %v1276 = vpop.permute.xlu0 %1275
    %v1285 = vunpack.c.l.b16 %v1267
    %v1286 = vunpack.c.l.b16 %v1268
    %v1287 = vunpack.c.l.b16 %v1269
    %v1288 = vunpack.c.l.b16 %v1270
    %v1289 = vunpack.c.l.b16 %v1271
    %v1290 = vunpack.c.l.b16 %v1272
    %v1291 = vunpack.c.l.b16 %v1273
    %v1292 = vunpack.c.l.b16 %v1274
    %v1293 = vpack.c.b16 %v1286, %v1285
    %v1294 = vpack.c.b16 %v1288, %v1287
    %v1295 = vpack.c.b16 %v1290, %v1289
    %v1296 = vpack.c.b16 %v1292, %v1291
    %v1302 = vsel %vm680, %v1276, 0
    %1304 = vmatprep.subr.bf16.mxu0 0
    %1305 = vmatpush1.bf16.msra.mxu0 %v1293
    %1306 = vmatprep.subr.bf16.mxu0 0
    %1307 = vmatpush1.bf16.msra.mxu0 %v1294
    %1308 = vmatprep.subr.bf16.mxu0 0
    %1309 = vmatpush1.bf16.msra.mxu0 %v1295
    %1310 = vmatprep.subr.bf16.mxu0 0
    %1311 = vmatpush1.bf16.msra.mxu0 %v1296
    %1312 = vmatprep.subr.bf16.mxu0 0
    %1313 = vmatpush1.bf16.msra.mxu0 0
    %1314 = vmatprep.subr.bf16.mxu0 0
    %1315 = vmatpush1.bf16.msra.mxu0 0
    %1316 = vmatprep.subr.bf16.mxu0 0
    %1317 = vmatpush1.bf16.msra.mxu0 0
    %1318 = vmatprep.subr.bf16.mxu0 0
    %1319 = vmatpush1.bf16.msra.mxu0 0
    %1320 = vmatprep.subr.bf16.mxu0 0
    %1321 = vmatpush1.bf16.msra.mxu0 0
    %1322 = vmatprep.subr.bf16.mxu0 0
    %1323 = vmatpush1.bf16.msra.mxu0 0
    %1324 = vmatprep.subr.bf16.mxu0 0
    %1325 = vmatpush1.bf16.msra.mxu0 0
    %1326 = vmatprep.subr.bf16.mxu0 0
    %1327 = vmatpush1.bf16.msra.mxu0 0
    %1328 = vmatprep.subr.bf16.mxu0 0
    %1329 = vmatpush1.bf16.msra.mxu0 0
    %1330 = vmatprep.subr.bf16.mxu0 0
    %1331 = vmatpush1.bf16.msra.mxu0 0
    %1332 = vmatprep.subr.bf16.mxu0 0
    %1333 = vmatpush1.bf16.msra.mxu0 0
    %1334 = vmatprep.subr.bf16.mxu0 0
    %1335 = vmatpush1.bf16.msra.mxu0 0
    %1336 = vmatprep.mubr.bf16.mxu0 0
    %1337 = vmatmul.mubr.bf16.gmra.mrb[0].mxu0 %v1302
    %v1338 = vpop.f32.mrb[0].mxu0
    %v1339 = vadd.f32 0.0, %v1338
    %v1340 = vpop.f32.mrb[0].mxu0
    %v1341 = vpop.f32.mrb[0].mxu0
    %v1342 = vpop.f32.mrb[0].mxu0
    %1343 = vdwg.mxu0
    %v1344 = vadd.f32 %v646, %v1339
    %v1345 = vld [vmem:[%s14 + $0x20] sm:$0xf]
    %v1346 = vld [vmem:[%s14 + $0x24] sm:$0xf]
    %v1347 = vld [vmem:[%s14 + $0x28] sm:$0xf]
    %v1348 = vld [vmem:[%s14 + $0x2c] sm:$0xf]
    %v1349 = vld [vmem:[%s14 + $0x30] sm:$0xf]
    %v1350 = vld [vmem:[%s14 + $0x34] sm:$0xf]
    %v1351 = vld [vmem:[%s14 + $0x38] sm:$0xf]
    %v1352 = vld [vmem:[%s14 + $0x3c] sm:$0xf]
    %1353 = vrot.lane.b32.xlu0 %v733, 64
    %v1354 = vpop.permute.xlu0 %1353
    %v1363 = vunpack.c.l.b16 %v1345
    %v1364 = vunpack.c.l.b16 %v1346
    %v1365 = vunpack.c.l.b16 %v1347
    %v1366 = vunpack.c.l.b16 %v1348
    %v1367 = vunpack.c.l.b16 %v1349
    %v1368 = vunpack.c.l.b16 %v1350
    %v1369 = vunpack.c.l.b16 %v1351
    %v1370 = vunpack.c.l.b16 %v1352
    %v1371 = vpack.c.b16 %v1364, %v1363
    %v1372 = vpack.c.b16 %v1366, %v1365
    %v1373 = vpack.c.b16 %v1368, %v1367
    %v1374 = vpack.c.b16 %v1370, %v1369
    %v1380 = vsel %vm680, %v1354, 0
    %1382 = vmatprep.subr.bf16.mxu0 0
    %1383 = vmatpush1.bf16.msra.mxu0 %v1371
    %1384 = vmatprep.subr.bf16.mxu0 0
    %1385 = vmatpush1.bf16.msra.mxu0 %v1372
    %1386 = vmatprep.subr.bf16.mxu0 0
    %1387 = vmatpush1.bf16.msra.mxu0 %v1373
    %1388 = vmatprep.subr.bf16.mxu0 0
    %1389 = vmatpush1.bf16.msra.mxu0 %v1374
    %1390 = vmatprep.subr.bf16.mxu0 0
    %1391 = vmatpush1.bf16.msra.mxu0 0
    %1392 = vmatprep.subr.bf16.mxu0 0
    %1393 = vmatpush1.bf16.msra.mxu0 0
    %1394 = vmatprep.subr.bf16.mxu0 0
    %1395 = vmatpush1.bf16.msra.mxu0 0
    %1396 = vmatprep.subr.bf16.mxu0 0
    %1397 = vmatpush1.bf16.msra.mxu0 0
    %1398 = vmatprep.subr.bf16.mxu0 0
    %1399 = vmatpush1.bf16.msra.mxu0 0
    %1400 = vmatprep.subr.bf16.mxu0 0
    %1401 = vmatpush1.bf16.msra.mxu0 0
    %1402 = vmatprep.subr.bf16.mxu0 0
    %1403 = vmatpush1.bf16.msra.mxu0 0
    %1404 = vmatprep.subr.bf16.mxu0 0
    %1405 = vmatpush1.bf16.msra.mxu0 0
    %1406 = vmatprep.subr.bf16.mxu0 0
    %1407 = vmatpush1.bf16.msra.mxu0 0
    %1408 = vmatprep.subr.bf16.mxu0 0
    %1409 = vmatpush1.bf16.msra.mxu0 0
    %1410 = vmatprep.subr.bf16.mxu0 0
    %1411 = vmatpush1.bf16.msra.mxu0 0
    %1412 = vmatprep.subr.bf16.mxu0 0
    %1413 = vmatpush1.bf16.msra.mxu0 0
    %1414 = vmatprep.mubr.bf16.mxu0 0
    %1415 = vmatmul.mubr.bf16.gmra.mrb[0].mxu0 %v1380
    %v1416 = vpop.f32.mrb[0].mxu0
    %v1417 = vadd.f32 0.0, %v1416
    %v1418 = vpop.f32.mrb[0].mxu0
    %v1419 = vpop.f32.mrb[0].mxu0
    %v1420 = vpop.f32.mrb[0].mxu0
    %1421 = vdwg.mxu0
    %v1422 = vadd.f32 %v1344, %v1417
    %v1423 = vld [vmem:[%s14 + $0x40] sm:$0xf]
    %v1424 = vld [vmem:[%s14 + $0x44] sm:$0xf]
    %v1425 = vld [vmem:[%s14 + $0x48] sm:$0xf]
    %v1426 = vld [vmem:[%s14 + $0x4c] sm:$0xf]
    %v1427 = vld [vmem:[%s14 + $0x50] sm:$0xf]
    %v1428 = vld [vmem:[%s14 + $0x54] sm:$0xf]
    %v1429 = vld [vmem:[%s14 + $0x58] sm:$0xf]
    %v1430 = vld [vmem:[%s14 + $0x5c] sm:$0xf]
    %1431 = vrot.lane.b32.xlu0 %v812, 64
    %v1432 = vpop.permute.xlu0 %1431
    %v1441 = vunpack.c.l.b16 %v1423
    %v1442 = vunpack.c.l.b16 %v1424
    %v1443 = vunpack.c.l.b16 %v1425
    %v1444 = vunpack.c.l.b16 %v1426
    %v1445 = vunpack.c.l.b16 %v1427
    %v1446 = vunpack.c.l.b16 %v1428
    %v1447 = vunpack.c.l.b16 %v1429
    %v1448 = vunpack.c.l.b16 %v1430
    %v1449 = vpack.c.b16 %v1442, %v1441
    %v1450 = vpack.c.b16 %v1444, %v1443
    %v1451 = vpack.c.b16 %v1446, %v1445
    %v1452 = vpack.c.b16 %v1448, %v1447
    %v1458 = vsel %vm680, %v1432, 0
    %1460 = vmatprep.subr.bf16.mxu0 0
    %1461 = vmatpush1.bf16.msra.mxu0 %v1449
    %1462 = vmatprep.subr.bf16.mxu0 0
    %1463 = vmatpush1.bf16.msra.mxu0 %v1450
    %1464 = vmatprep.subr.bf16.mxu0 0
    %1465 = vmatpush1.bf16.msra.mxu0 %v1451
    %1466 = vmatprep.subr.bf16.mxu0 0
    %1467 = vmatpush1.bf16.msra.mxu0 %v1452
    %1468 = vmatprep.subr.bf16.mxu0 0
    %1469 = vmatpush1.bf16.msra.mxu0 0
    %1470 = vmatprep.subr.bf16.mxu0 0
    %1471 = vmatpush1.bf16.msra.mxu0 0
    %1472 = vmatprep.subr.bf16.mxu0 0
    %1473 = vmatpush1.bf16.msra.mxu0 0
    %1474 = vmatprep.subr.bf16.mxu0 0
    %1475 = vmatpush1.bf16.msra.mxu0 0
    %1476 = vmatprep.subr.bf16.mxu0 0
    %1477 = vmatpush1.bf16.msra.mxu0 0
    %1478 = vmatprep.subr.bf16.mxu0 0
    %1479 = vmatpush1.bf16.msra.mxu0 0
    %1480 = vmatprep.subr.bf16.mxu0 0
    %1481 = vmatpush1.bf16.msra.mxu0 0
    %1482 = vmatprep.subr.bf16.mxu0 0
    %1483 = vmatpush1.bf16.msra.mxu0 0
    %1484 = vmatprep.subr.bf16.mxu0 0
    %1485 = vmatpush1.bf16.msra.mxu0 0
    %1486 = vmatprep.subr.bf16.mxu0 0
    %1487 = vmatpush1.bf16.msra.mxu0 0
    %1488 = vmatprep.subr.bf16.mxu0 0
    %1489 = vmatpush1.bf16.msra.mxu0 0
    %1490 = vmatprep.subr.bf16.mxu0 0
    %1491 = vmatpush1.bf16.msra.mxu0 0
    %1492 = vmatprep.mubr.bf16.mxu0 0
    %1493 = vmatmul.mubr.bf16.gmra.mrb[0].mxu0 %v1458
    %v1494 = vpop.f32.mrb[0].mxu0
    %v1495 = vadd.f32 0.0, %v1494
    %v1496 = vpop.f32.mrb[0].mxu0
    %v1497 = vpop.f32.mrb[0].mxu0
    %v1498 = vpop.f32.mrb[0].mxu0
    %1499 = vdwg.mxu0
    %v1500 = vadd.f32 %v1422, %v1495
    %v1501 = vld [vmem:[%s14 + $0x60] sm:$0xf]
    %v1502 = vld [vmem:[%s14 + $0x64] sm:$0xf]
    %v1503 = vld [vmem:[%s14 + $0x68] sm:$0xf]
    %v1504 = vld [vmem:[%s14 + $0x6c] sm:$0xf]
    %v1505 = vld [vmem:[%s14 + $0x70] sm:$0xf]
    %v1506 = vld [vmem:[%s14 + $0x74] sm:$0xf]
    %v1507 = vld [vmem:[%s14 + $0x78] sm:$0xf]
    %v1508 = vld [vmem:[%s14 + $0x7c] sm:$0xf]
    %1509 = vrot.lane.b32.xlu0 %v889, 64
    %v1510 = vpop.permute.xlu0 %1509
    %v1519 = vunpack.c.l.b16 %v1501
    %v1520 = vunpack.c.l.b16 %v1502
    %v1521 = vunpack.c.l.b16 %v1503
    %v1522 = vunpack.c.l.b16 %v1504
    %v1523 = vunpack.c.l.b16 %v1505
    %v1524 = vunpack.c.l.b16 %v1506
    %v1525 = vunpack.c.l.b16 %v1507
    %v1526 = vunpack.c.l.b16 %v1508
    %v1527 = vpack.c.b16 %v1520, %v1519
    %v1528 = vpack.c.b16 %v1522, %v1521
    %v1529 = vpack.c.b16 %v1524, %v1523
    %v1530 = vpack.c.b16 %v1526, %v1525
    %v1536 = vsel %vm680, %v1510, 0
    %1538 = vmatprep.subr.bf16.mxu0 0
    %1539 = vmatpush1.bf16.msra.mxu0 %v1527
    %1540 = vmatprep.subr.bf16.mxu0 0
    %1541 = vmatpush1.bf16.msra.mxu0 %v1528
    %1542 = vmatprep.subr.bf16.mxu0 0
    %1543 = vmatpush1.bf16.msra.mxu0 %v1529
    %1544 = vmatprep.subr.bf16.mxu0 0
    %1545 = vmatpush1.bf16.msra.mxu0 %v1530
    %1546 = vmatprep.subr.bf16.mxu0 0
    %1547 = vmatpush1.bf16.msra.mxu0 0
    %1548 = vmatprep.subr.bf16.mxu0 0
    %1549 = vmatpush1.bf16.msra.mxu0 0
    %1550 = vmatprep.subr.bf16.mxu0 0
    %1551 = vmatpush1.bf16.msra.mxu0 0
    %1552 = vmatprep.subr.bf16.mxu0 0
    %1553 = vmatpush1.bf16.msra.mxu0 0
    %1554 = vmatprep.subr.bf16.mxu0 0
    %1555 = vmatpush1.bf16.msra.mxu0 0
    %1556 = vmatprep.subr.bf16.mxu0 0
    %1557 = vmatpush1.bf16.msra.mxu0 0
    %1558 = vmatprep.subr.bf16.mxu0 0
    %1559 = vmatpush1.bf16.msra.mxu0 0
    %1560 = vmatprep.subr.bf16.mxu0 0
    %1561 = vmatpush1.bf16.msra.mxu0 0
    %1562 = vmatprep.subr.bf16.mxu0 0
    %1563 = vmatpush1.bf16.msra.mxu0 0
    %1564 = vmatprep.subr.bf16.mxu0 0
    %1565 = vmatpush1.bf16.msra.mxu0 0
    %1566 = vmatprep.subr.bf16.mxu0 0
    %1567 = vmatpush1.bf16.msra.mxu0 0
    %1568 = vmatprep.subr.bf16.mxu0 0
    %1569 = vmatpush1.bf16.msra.mxu0 0
    %1570 = vmatprep.mubr.bf16.mxu0 0
    %1571 = vmatmul.mubr.bf16.gmra.mrb[0].mxu0 %v1536
    %v1572 = vpop.f32.mrb[0].mxu0
    %v1573 = vadd.f32 0.0, %v1572
    %v1574 = vpop.f32.mrb[0].mxu0
    %v1575 = vpop.f32.mrb[0].mxu0
    %v1576 = vpop.f32.mrb[0].mxu0
    %1577 = vdwg.mxu0
    %v1578 = vadd.f32 %v1500, %v1573
    %v1579 = vld [vmem:[%s14 + $0x80] sm:$0xf]
    %v1580 = vld [vmem:[%s14 + $0x84] sm:$0xf]
    %v1581 = vld [vmem:[%s14 + $0x88] sm:$0xf]
    %v1582 = vld [vmem:[%s14 + $0x8c] sm:$0xf]
    %v1583 = vld [vmem:[%s14 + $0x90] sm:$0xf]
    %v1584 = vld [vmem:[%s14 + $0x94] sm:$0xf]
    %v1585 = vld [vmem:[%s14 + $0x98] sm:$0xf]
    %v1586 = vld [vmem:[%s14 + $0x9c] sm:$0xf]
    %1587 = vrot.lane.b32.xlu0 %v966, 64
    %v1588 = vpop.permute.xlu0 %1587
    %v1597 = vunpack.c.l.b16 %v1579
    %v1598 = vunpack.c.l.b16 %v1580
    %v1599 = vunpack.c.l.b16 %v1581
    %v1600 = vunpack.c.l.b16 %v1582
    %v1601 = vunpack.c.l.b16 %v1583
    %v1602 = vunpack.c.l.b16 %v1584
    %v1603 = vunpack.c.l.b16 %v1585
    %v1604 = vunpack.c.l.b16 %v1586
    %v1605 = vpack.c.b16 %v1598, %v1597
    %v1606 = vpack.c.b16 %v1600, %v1599
    %v1607 = vpack.c.b16 %v1602, %v1601
    %v1608 = vpack.c.b16 %v1604, %v1603
    %v1614 = vsel %vm680, %v1588, 0
    %1616 = vmatprep.subr.bf16.mxu0 0
    %1617 = vmatpush1.bf16.msra.mxu0 %v1605
    %1618 = vmatprep.subr.bf16.mxu0 0
    %1619 = vmatpush1.bf16.msra.mxu0 %v1606
    %1620 = vmatprep.subr.bf16.mxu0 0
    %1621 = vmatpush1.bf16.msra.mxu0 %v1607
    %1622 = vmatprep.subr.bf16.mxu0 0
    %1623 = vmatpush1.bf16.msra.mxu0 %v1608
    %1624 = vmatprep.subr.bf16.mxu0 0
    %1625 = vmatpush1.bf16.msra.mxu0 0
    %1626 = vmatprep.subr.bf16.mxu0 0
    %1627 = vmatpush1.bf16.msra.mxu0 0
    %1628 = vmatprep.subr.bf16.mxu0 0
    %1629 = vmatpush1.bf16.msra.mxu0 0
    %1630 = vmatprep.subr.bf16.mxu0 0
    %1631 = vmatpush1.bf16.msra.mxu0 0
    %1632 = vmatprep.subr.bf16.mxu0 0
    %1633 = vmatpush1.bf16.msra.mxu0 0
    %1634 = vmatprep.subr.bf16.mxu0 0
    %1635 = vmatpush1.bf16.msra.mxu0 0
    %1636 = vmatprep.subr.bf16.mxu0 0
    %1637 = vmatpush1.bf16.msra.mxu0 0
    %1638 = vmatprep.subr.bf16.mxu0 0
    %1639 = vmatpush1.bf16.msra.mxu0 0
    %1640 = vmatprep.subr.bf16.mxu0 0
    %1641 = vmatpush1.bf16.msra.mxu0 0
    %1642 = vmatprep.subr.bf16.mxu0 0
    %1643 = vmatpush1.bf16.msra.mxu0 0
    %1644 = vmatprep.subr.bf16.mxu0 0
    %1645 = vmatpush1.bf16.msra.mxu0 0
    %1646 = vmatprep.subr.bf16.mxu0 0
    %1647 = vmatpush1.bf16.msra.mxu0 0
    %1648 = vmatprep.mubr.bf16.mxu0 0
    %1649 = vmatmul.mubr.bf16.gmra.mrb[0].mxu0 %v1614
    %v1650 = vpop.f32.mrb[0].mxu0
    %v1651 = vadd.f32 0.0, %v1650
    %v1652 = vpop.f32.mrb[0].mxu0
    %v1653 = vpop.f32.mrb[0].mxu0
    %v1654 = vpop.f32.mrb[0].mxu0
    %1655 = vdwg.mxu0
    %v1656 = vadd.f32 %v1578, %v1651
    %v1657 = vld [vmem:[%s14 + $0xa0] sm:$0xf]
    %v1658 = vld [vmem:[%s14 + $0xa4] sm:$0xf]
    %v1659 = vld [vmem:[%s14 + $0xa8] sm:$0xf]
    %v1660 = vld [vmem:[%s14 + $0xac] sm:$0xf]
    %v1661 = vld [vmem:[%s14 + $0xb0] sm:$0xf]
    %v1662 = vld [vmem:[%s14 + $0xb4] sm:$0xf]
    %v1663 = vld [vmem:[%s14 + $0xb8] sm:$0xf]
    %v1664 = vld [vmem:[%s14 + $0xbc] sm:$0xf]
    %1665 = vrot.lane.b32.xlu0 %v1043, 64
    %v1666 = vpop.permute.xlu0 %1665
    %v1675 = vunpack.c.l.b16 %v1657
    %v1676 = vunpack.c.l.b16 %v1658
    %v1677 = vunpack.c.l.b16 %v1659
    %v1678 = vunpack.c.l.b16 %v1660
    %v1679 = vunpack.c.l.b16 %v1661
    %v1680 = vunpack.c.l.b16 %v1662
    %v1681 = vunpack.c.l.b16 %v1663
    %v1682 = vunpack.c.l.b16 %v1664
    %v1683 = vpack.c.b16 %v1676, %v1675
    %v1684 = vpack.c.b16 %v1678, %v1677
    %v1685 = vpack.c.b16 %v1680, %v1679
    %v1686 = vpack.c.b16 %v1682, %v1681
    %v1692 = vsel %vm680, %v1666, 0
    %1694 = vmatprep.subr.bf16.mxu0 0
    %1695 = vmatpush1.bf16.msra.mxu0 %v1683
    %1696 = vmatprep.subr.bf16.mxu0 0
    %1697 = vmatpush1.bf16.msra.mxu0 %v1684
    %1698 = vmatprep.subr.bf16.mxu0 0
    %1699 = vmatpush1.bf16.msra.mxu0 %v1685
    %1700 = vmatprep.subr.bf16.mxu0 0
    %1701 = vmatpush1.bf16.msra.mxu0 %v1686
    %1702 = vmatprep.subr.bf16.mxu0 0
    %1703 = vmatpush1.bf16.msra.mxu0 0
    %1704 = vmatprep.subr.bf16.mxu0 0
    %1705 = vmatpush1.bf16.msra.mxu0 0
    %1706 = vmatprep.subr.bf16.mxu0 0
    %1707 = vmatpush1.bf16.msra.mxu0 0
    %1708 = vmatprep.subr.bf16.mxu0 0
    %1709 = vmatpush1.bf16.msra.mxu0 0
    %1710 = vmatprep.subr.bf16.mxu0 0
    %1711 = vmatpush1.bf16.msra.mxu0 0
    %1712 = vmatprep.subr.bf16.mxu0 0
    %1713 = vmatpush1.bf16.msra.mxu0 0
    %1714 = vmatprep.subr.bf16.mxu0 0
    %1715 = vmatpush1.bf16.msra.mxu0 0
    %1716 = vmatprep.subr.bf16.mxu0 0
    %1717 = vmatpush1.bf16.msra.mxu0 0
    %1718 = vmatprep.subr.bf16.mxu0 0
    %1719 = vmatpush1.bf16.msra.mxu0 0
    %1720 = vmatprep.subr.bf16.mxu0 0
    %1721 = vmatpush1.bf16.msra.mxu0 0
    %1722 = vmatprep.subr.bf16.mxu0 0
    %1723 = vmatpush1.bf16.msra.mxu0 0
    %1724 = vmatprep.subr.bf16.mxu0 0
    %1725 = vmatpush1.bf16.msra.mxu0 0
    %1726 = vmatprep.mubr.bf16.mxu0 0
    %1727 = vmatmul.mubr.bf16.gmra.mrb[0].mxu0 %v1692
    %v1728 = vpop.f32.mrb[0].mxu0
    %v1729 = vadd.f32 0.0, %v1728
    %v1730 = vpop.f32.mrb[0].mxu0
    %v1731 = vpop.f32.mrb[0].mxu0
    %v1732 = vpop.f32.mrb[0].mxu0
    %1733 = vdwg.mxu0
    %v1734 = vadd.f32 %v1656, %v1729
    %v1735 = vld [vmem:[%s14 + $0xc0] sm:$0xf]
    %v1736 = vld [vmem:[%s14 + $0xc4] sm:$0xf]
    %v1737 = vld [vmem:[%s14 + $0xc8] sm:$0xf]
    %v1738 = vld [vmem:[%s14 + $0xcc] sm:$0xf]
    %v1739 = vld [vmem:[%s14 + $0xd0] sm:$0xf]
    %v1740 = vld [vmem:[%s14 + $0xd4] sm:$0xf]
    %v1741 = vld [vmem:[%s14 + $0xd8] sm:$0xf]
    %v1742 = vld [vmem:[%s14 + $0xdc] sm:$0xf]
    %1743 = vrot.lane.b32.xlu0 %v1120, 64
    %v1744 = vpop.permute.xlu0 %1743
    %v1753 = vunpack.c.l.b16 %v1735
    %v1754 = vunpack.c.l.b16 %v1736
    %v1755 = vunpack.c.l.b16 %v1737
    %v1756 = vunpack.c.l.b16 %v1738
    %v1757 = vunpack.c.l.b16 %v1739
    %v1758 = vunpack.c.l.b16 %v1740
    %v1759 = vunpack.c.l.b16 %v1741
    %v1760 = vunpack.c.l.b16 %v1742
    %v1761 = vpack.c.b16 %v1754, %v1753
    %v1762 = vpack.c.b16 %v1756, %v1755
    %v1763 = vpack.c.b16 %v1758, %v1757
    %v1764 = vpack.c.b16 %v1760, %v1759
    %v1770 = vsel %vm680, %v1744, 0
    %1772 = vmatprep.subr.bf16.mxu0 0
    %1773 = vmatpush1.bf16.msra.mxu0 %v1761
    %1774 = vmatprep.subr.bf16.mxu0 0
    %1775 = vmatpush1.bf16.msra.mxu0 %v1762
    %1776 = vmatprep.subr.bf16.mxu0 0
    %1777 = vmatpush1.bf16.msra.mxu0 %v1763
    %1778 = vmatprep.subr.bf16.mxu0 0
    %1779 = vmatpush1.bf16.msra.mxu0 %v1764
    %1780 = vmatprep.subr.bf16.mxu0 0
    %1781 = vmatpush1.bf16.msra.mxu0 0
    %1782 = vmatprep.subr.bf16.mxu0 0
    %1783 = vmatpush1.bf16.msra.mxu0 0
    %1784 = vmatprep.subr.bf16.mxu0 0
    %1785 = vmatpush1.bf16.msra.mxu0 0
    %1786 = vmatprep.subr.bf16.mxu0 0
    %1787 = vmatpush1.bf16.msra.mxu0 0
    %1788 = vmatprep.subr.bf16.mxu0 0
    %1789 = vmatpush1.bf16.msra.mxu0 0
    %1790 = vmatprep.subr.bf16.mxu0 0
    %1791 = vmatpush1.bf16.msra.mxu0 0
    %1792 = vmatprep.subr.bf16.mxu0 0
    %1793 = vmatpush1.bf16.msra.mxu0 0
    %1794 = vmatprep.subr.bf16.mxu0 0
    %1795 = vmatpush1.bf16.msra.mxu0 0
    %1796 = vmatprep.subr.bf16.mxu0 0
    %1797 = vmatpush1.bf16.msra.mxu0 0
    %1798 = vmatprep.subr.bf16.mxu0 0
    %1799 = vmatpush1.bf16.msra.mxu0 0
    %1800 = vmatprep.subr.bf16.mxu0 0
    %1801 = vmatpush1.bf16.msra.mxu0 0
    %1802 = vmatprep.subr.bf16.mxu0 0
    %1803 = vmatpush1.bf16.msra.mxu0 0
    %1804 = vmatprep.mubr.bf16.mxu0 0
    %1805 = vmatmul.mubr.bf16.gmra.mrb[0].mxu0 %v1770
    %v1806 = vpop.f32.mrb[0].mxu0
    %v1807 = vadd.f32 0.0, %v1806
    %v1808 = vpop.f32.mrb[0].mxu0
    %v1809 = vpop.f32.mrb[0].mxu0
    %v1810 = vpop.f32.mrb[0].mxu0
    %1811 = vdwg.mxu0
    %v1812 = vadd.f32 %v1734, %v1807
    %v1813 = vld [vmem:[%s14 + $0xe0] sm:$0xf]
    %v1814 = vld [vmem:[%s14 + $0xe4] sm:$0xf]
    %v1815 = vld [vmem:[%s14 + $0xe8] sm:$0xf]
    %v1816 = vld [vmem:[%s14 + $0xec] sm:$0xf]
    %v1817 = vld [vmem:[%s14 + $0xf0] sm:$0xf]
    %v1818 = vld [vmem:[%s14 + $0xf4] sm:$0xf]
    %v1819 = vld [vmem:[%s14 + $0xf8] sm:$0xf]
    %v1820 = vld [vmem:[%s14 + $0xfc] sm:$0xf]
    %1821 = vrot.lane.b32.xlu0 %v1197, 64
    %v1822 = vpop.permute.xlu0 %1821
    %v1831 = vunpack.c.l.b16 %v1813
    %v1832 = vunpack.c.l.b16 %v1814
    %v1833 = vunpack.c.l.b16 %v1815
    %v1834 = vunpack.c.l.b16 %v1816
    %v1835 = vunpack.c.l.b16 %v1817
    %v1836 = vunpack.c.l.b16 %v1818
    %v1837 = vunpack.c.l.b16 %v1819
    %v1838 = vunpack.c.l.b16 %v1820
    %v1839 = vpack.c.b16 %v1832, %v1831
    %v1840 = vpack.c.b16 %v1834, %v1833
    %v1841 = vpack.c.b16 %v1836, %v1835
    %v1842 = vpack.c.b16 %v1838, %v1837
    %v1848 = vsel %vm680, %v1822, 0
    %1850 = vmatprep.subr.bf16.mxu0 0
    %1851 = vmatpush1.bf16.msra.mxu0 %v1839
    %1852 = vmatprep.subr.bf16.mxu0 0
    %1853 = vmatpush1.bf16.msra.mxu0 %v1840
    %1854 = vmatprep.subr.bf16.mxu0 0
    %1855 = vmatpush1.bf16.msra.mxu0 %v1841
    %1856 = vmatprep.subr.bf16.mxu0 0
    %1857 = vmatpush1.bf16.msra.mxu0 %v1842
    %1858 = vmatprep.subr.bf16.mxu0 0
    %1859 = vmatpush1.bf16.msra.mxu0 0
    %1860 = vmatprep.subr.bf16.mxu0 0
    %1861 = vmatpush1.bf16.msra.mxu0 0
    %1862 = vmatprep.subr.bf16.mxu0 0
    %1863 = vmatpush1.bf16.msra.mxu0 0
    %1864 = vmatprep.subr.bf16.mxu0 0
    %1865 = vmatpush1.bf16.msra.mxu0 0
    %1866 = vmatprep.subr.bf16.mxu0 0
    %1867 = vmatpush1.bf16.msra.mxu0 0
    %1868 = vmatprep.subr.bf16.mxu0 0
    %1869 = vmatpush1.bf16.msra.mxu0 0
    %1870 = vmatprep.subr.bf16.mxu0 0
    %1871 = vmatpush1.bf16.msra.mxu0 0
    %1872 = vmatprep.subr.bf16.mxu0 0
    %1873 = vmatpush1.bf16.msra.mxu0 0
    %1874 = vmatprep.subr.bf16.mxu0 0
    %1875 = vmatpush1.bf16.msra.mxu0 0
    %1876 = vmatprep.subr.bf16.mxu0 0
    %1877 = vmatpush1.bf16.msra.mxu0 0
    %1878 = vmatprep.subr.bf16.mxu0 0
    %1879 = vmatpush1.bf16.msra.mxu0 0
    %1880 = vmatprep.subr.bf16.mxu0 0
    %1881 = vmatpush1.bf16.msra.mxu0 0
    %1882 = vmatprep.mubr.bf16.mxu0 0
    %1883 = vmatmul.mubr.bf16.gmra.mrb[0].mxu0 %v1848
    %v1884 = vpop.f32.mrb[0].mxu0
    %v1885 = vadd.f32 0.0, %v1884
    %v1886 = vpop.f32.mrb[0].mxu0
    %v1887 = vpop.f32.mrb[0].mxu0
    %v1888 = vpop.f32.mrb[0].mxu0
    %1889 = vdwg.mxu0
    %v1890 = vadd.f32 %v1812, %v1885
    %1891 = vst [vmem:[#allocation2 + $0x1] sm:$0x1] %v1890
    // Predicated region
    $region73: #{aam_forward.1} parent=1 // pred_check
      _
    $region74: #{aam_forward.1} parent=1 // pred_check_branch
      %1893 = sbr.rel (0) target = $region76
    $region75: #{aam_forward.1} parent=1 // pred_region
      %s1895 = ssub.s32 32, 32
      %1896 = vsyncadd [#allocation3], %s1895
      %s1898 = sshll.u32 [#allocation2], 4
      %s1899 = int_to_ptr.vmem [resolvable:$true] %s1898
      %1901 = dma.vmem_to_hbm [thread:$0]  %s1899, 32, %s16, [#allocation3]
    $region76: #{aam_forward.1} parent=1 // pred_fallthru
      _
    // Predicated region
    $region77: #{aam_forward.1} parent=1 // pred_check
      _
    $region78: #{aam_forward.1} parent=1 // pred_check_branch
      %1903 = sbr.rel (0) target = $region80
    $region79: #{aam_forward.1} parent=1 // pred_region
      _
    $region80: #{aam_forward.1} parent=1 // pred_fallthru
      _
    // Predicated region
    $region81: #{aam_forward.1} parent=1 // pred_check
      _
    $region82: #{aam_forward.1} parent=1 // pred_check_branch
      %1905 = sbr.rel (0) target = $region84
    $region83: #{aam_forward.1} parent=1 // pred_region
      %1906 = dma.done [#allocation3], 32
    $region84: #{aam_forward.1} parent=1 // pred_fallthru
      _
    // Predicated region
    $region85: #{aam_forward.1} parent=1 // pred_check
      _
    $region86: #{aam_forward.1} parent=1 // pred_check_branch
      %1908 = sbr.rel (0) target = $region88
    $region87: #{aam_forward.1} parent=1 // pred_region
      _
    $region88: #{aam_forward.1} parent=1 // pred_fallthru
      _
    %1909 = vsyncpa [#allocation3], 1

</llo_original>
